<compile_context>
chip_gen: v7x
topology: tpu7x:2x2x1
jax: 0.10.0
libtpu: 0.0.40
codegen_flags: <defaults>
</compile_context>

<pallas_src>
import functools
import math

import jax
import jax.numpy as jnp
from jax.experimental import pallas as pl
from jax.experimental.pallas import tpu as pltpu

LEAK = 0.2   # LeakyReLU negative_slope (use_leaky=True default)
EPS = 1e-8   # AdaIN eps


def _leaky(v):
    return jnp.where(v >= 0, v, LEAK * v)


def _lane_roll(x, amount, use_xlu):
    """numpy-roll along the lane axis: out[:, p] = x[:, (p - amount) mod N]."""
    if use_xlu:
        return pltpu.roll(x, shift=amount, axis=1)   # XLU rotate on TPU
    return jnp.roll(x, amount, axis=1)               # portable fallback


def gconv_block_kernel(x_ref,                                   # [Cp0, N]
                       w0_ref, b0_ref, ns0_ref, n0_ref, ys0_ref, yb0_ref,
                       w1_ref, b1_ref, ns1_ref, n1_ref, ys1_ref, yb1_ref,
                       out_ref,                                 # [Cout, N]
                       *, H, W, bt, use_xlu_roll):
    HW = H * W
    N = bt * HW                     # batch tile stacked along the lane axis
    log2_w = int(round(math.log2(W)))
    log2_hw = int(round(math.log2(HW)))

    # ---- hoisted lane-position helpers (computed once, shared by both layers)
    lane = jax.lax.broadcasted_iota(jnp.int32, (1, N), 1)
    col = lane & (W - 1)                       # column within the image
    row = (lane >> log2_w) & (H - 1)           # row within the image
    rvalid = {dy: (row + dy >= 0) & (row + dy < H) for dy in (-1, 0, 1)}
    cvalid = {dx: (col + dx >= 0) & (col + dx < W) for dx in (-1, 0, 1)}
    taps = [(dy, dx) for dy in (-1, 0, 1) for dx in (-1, 0, 1)]
    tap_masks = [rvalid[dy] & cvalid[dx] for dy, dx in taps]
    if bt > 1:                                 # per-image masks for AdaIN stats
        img_idx = lane >> log2_hw
        img_masks = [img_idx == i for i in range(bt)]

    def conv3x3(xin, w_ref):
        """xin: [Cp, N] f32.  One MXU contraction [Cout, 9*Cp] @ [9*Cp, N]."""
        cols = []
        for (dy, dx), mask in zip(taps, tap_masks):
            s = dy * W + dx                    # flat source offset of this tap
            shifted = xin if s == 0 else _lane_roll(xin, (-s) % N, use_xlu_roll)
            # zero-padding: taps reaching outside the image (incl. any wrap
            # across image boundaries from the batch stacking) are masked to 0.
            cols.append(jnp.where(mask, shifted, 0.0))
        # im2col stays in vregs (no VMEM scratch round trip); bf16 at the MXU.
        xcol = jnp.concatenate(cols, axis=0).astype(w_ref.dtype)   # [9*Cp, N]
        return jnp.dot(w_ref[...], xcol, preferred_element_type=jnp.float32)

    def layer(xin, w_ref, b_ref, ns_ref, n_ref, ys_ref, yb_ref):
        # EqualizedConv2d (equalized-lr scale folded into the weights) + bias.
        h = conv3x3(xin, w_ref) + b_ref[...]                       # [Cout, N]
        # AddNoise (noise streamed from HBM, scale init = 0).
        h = h + n_ref[...] * ns_ref[...]
        # AdaIN: per-image stats over HW, two-pass, unbiased var (torch.var).
        ys = ys_ref[0]                                             # [Cout, bt]
        yb = yb_ref[0]
        if bt == 1:
            mu = jnp.sum(h, axis=1, keepdims=True) * (1.0 / HW)
            hc = h - mu
            var = jnp.sum(hc * hc, axis=1, keepdims=True) * (1.0 / (HW - 1)) + EPS
            h = hc * (ys * jax.lax.rsqrt(var)) + yb
        else:
            mu_full = jnp.zeros_like(h)
            for i in range(bt):
                m = img_masks[i]
                s1 = jnp.sum(jnp.where(m, h, 0.0), axis=1, keepdims=True)
                mu_full = jnp.where(m, s1 * (1.0 / HW), mu_full)
            hc = h - mu_full
            hc2 = hc * hc
            res = jnp.zeros_like(h)
            for i in range(bt):
                m = img_masks[i]
                s2 = jnp.sum(jnp.where(m, hc2, 0.0), axis=1, keepdims=True)
                var = s2 * (1.0 / (HW - 1)) + EPS
                sc = ys[:, i:i + 1] * jax.lax.rsqrt(var)           # [Cout, 1]
                res = jnp.where(m, hc * sc + yb[:, i:i + 1], res)
            h = res
        return _leaky(h)

    x = x_ref[...].astype(jnp.float32)                             # [Cp0, N]
    h0 = layer(x, w0_ref, b0_ref, ns0_ref, n0_ref, ys0_ref, yb0_ref)
    h1 = layer(h0, w1_ref, b1_ref, ns1_ref, n1_ref, ys1_ref, yb1_ref)
    out_ref[...] = h1.astype(out_ref.dtype)


def _style_affine(w, aff_w, aff_b, cout, G, bt):
    """EqualizedLinear (scale folded into aff_w) + LeakyReLU -> (ys, yb)."""
    y = _leaky(jnp.dot(w, aff_w) + aff_b)          # [B, 2*Cout]
    ys = y[:, :cout].reshape(G, bt, cout).transpose(0, 2, 1)   # [G, Cout, bt]
    yb = y[:, cout:].reshape(G, bt, cout).transpose(0, 2, 1)
    return ys, yb


@functools.partial(jax.jit, static_argnames=("batch_tile",))
def gconv_block(x_nchw, w, params0, params1, noise_key, *, batch_tile=None):
    """GConvBlock.forward: two fused GConvLayers sharing the style vector w."""
    B, Cin, H, W_sp = x_nchw.shape
    HW = H * W_sp
    # TODO(synk): generic (non power-of-two) H/W needs vector int div/mod in the
    # kernel; StyleGAN resolutions are powers of two so we assert instead.
    assert (H & (H - 1)) == 0 and (W_sp & (W_sp - 1)) == 0

    cw0, cb0, ns0, aw0, ab0 = params0
    cw1, cb1, ns1, aw1, ab1 = params1
    Cout = cw0.shape[0]
    assert Cout % 8 == 0, "layer-1 channels must be sublane aligned"
    cp0 = -(-Cin // 8) * 8                          # round Cin up to 8

    if batch_tile is None:
        # Whole (sub)batch per grid step; keep 2 steps when B splits evenly and
        # is large enough so v7x's two TensorCores both get work.
        batch_tile = B // 2 if (B % 2 == 0 and B >= 4) else B
    bt = batch_tile
    assert B % bt == 0
    G = B // bt
    N = bt * HW
    assert G == 1 or N % 128 == 0

    # Tiny style matmuls stay in XLA (M = B would be pure MXU padding).
    ys0, yb0 = _style_affine(w, aw0, ab0, Cout, G, bt)
    ys1, yb1 = _style_affine(w, aw1, ab1, Cout, G, bt)

    # Noise ~ N(0,1) like torch.randn_like, drawn in the wrapper (the in-kernel
    # TPU PRNG has no CPU/interpret lowering) and streamed in.
    k0, k1 = jax.random.split(noise_key)
    def to_lanes(a):                               # [B, C, HW] -> [C, B*HW]
        Bb, C, hw = a.shape
        return a.transpose(1, 0, 2).reshape(C, Bb * hw)
    n0 = to_lanes(jax.random.normal(k0, (B, Cout, HW), jnp.float32))
    n1 = to_lanes(jax.random.normal(k1, (B, Cout, HW), jnp.float32))

    # Activations: NCHW -> [C, B*HW], batch stacked along the lane axis.
    x_flat = to_lanes(x_nchw.reshape(B, Cin, HW))
    if cp0 != Cin:                                 # channel padding to sublane
        x_flat = jnp.pad(x_flat, ((0, cp0 - Cin), (0, 0)))
        cw0 = jnp.pad(cw0.reshape(Cout, 9, Cin),
                      ((0, 0), (0, 0), (0, cp0 - Cin))).reshape(Cout, 9 * cp0)

    # bf16 at the MXU boundary (f32 accumulation); flagged precision change.
    cw0 = cw0.astype(jnp.bfloat16)
    cw1 = cw1.astype(jnp.bfloat16)

    full2 = lambda g: (0, 0)
    lane_g = lambda g: (0, g)
    tile_g = lambda g: (g, 0, 0)
    use_xlu_roll = jax.default_backend() == "tpu"

    out = pl.pallas_call(
        functools.partial(gconv_block_kernel, H=H, W=W_sp, bt=bt,
                          use_xlu_roll=use_xlu_roll),
        out_shape=jax.ShapeDtypeStruct((Cout, B * HW), jnp.float32),
        grid=(G,),
        in_specs=[
            pl.BlockSpec((cp0, N), lane_g),            # x
            pl.BlockSpec((Cout, 9 * cp0), full2),      # conv w, layer 0 (bf16)
            pl.BlockSpec((Cout, 1), full2),            # conv bias 0
            pl.BlockSpec((Cout, 1), full2),            # noise scale 0
            pl.BlockSpec((Cout, N), lane_g),           # noise 0
            pl.BlockSpec((1, Cout, bt), tile_g),       # ys0
            pl.BlockSpec((1, Cout, bt), tile_g),       # yb0
            pl.BlockSpec((Cout, 9 * Cout), full2),     # conv w, layer 1 (bf16)
            pl.BlockSpec((Cout, 1), full2),            # conv bias 1
            pl.BlockSpec((Cout, 1), full2),            # noise scale 1
            pl.BlockSpec((Cout, N), lane_g),           # noise 1
            pl.BlockSpec((1, Cout, bt), tile_g),       # ys1
            pl.BlockSpec((1, Cout, bt), tile_g),       # yb1
        ],
        out_specs=pl.BlockSpec((Cout, N), lane_g),
        compiler_params=pltpu.CompilerParams(
            dimension_semantics=("parallel",),         # split over v7x's 2 TCs
            vmem_limit_bytes=64 * 1024 * 1024,
        ),
    )(x_flat, cw0, cb0, ns0, n0, ys0, yb0, cw1, cb1, ns1, n1, ys1, yb1)

    return out.reshape(Cout, B, HW).transpose(1, 0, 2).reshape(B, Cout, H, W_sp)


def init_layer_params(key, cin, cout, w_dim, ksize=3):
    """One GConvLayer's parameters with the equalized-lr scales folded in.

    conv_w is stored in the kernel's im2col layout [Cout, 9*Cin]:
    (W_pt * scale).transpose(0, 2, 3, 1).reshape(Cout, 9*Cin), taps row-major
    (ky, kx), input channel fastest -- matching the kernel's tap/channel order.
    """
    k1, k2 = jax.random.split(key)
    conv_scale = (2.0 ** 0.5) * math.sqrt(1.0 / (ksize * ksize * cin))
    w_pt = jax.random.normal(k1, (cout, cin, ksize, ksize), jnp.float32)
    conv_w = (w_pt * conv_scale).transpose(0, 2, 3, 1).reshape(cout, ksize * ksize * cin)
    conv_b = jnp.zeros((cout, 1), jnp.float32)
    noise_scale = jnp.zeros((cout, 1), jnp.float32)          # AddNoise init = 0
    aff_scale = 1.0 * math.sqrt(1.0 / w_dim)                 # EqualizedLinear gain=1
    aff_w = (jax.random.normal(k2, (2 * cout, w_dim), jnp.float32) * aff_scale).T
    aff_b = jnp.concatenate([jnp.ones((cout,), jnp.float32),
                             jnp.zeros((cout,), jnp.float32)]).reshape(1, 2 * cout)
    return conv_w, conv_b, noise_scale, aff_w, aff_b


if __name__ == "__main__":
    B, Cin, Cout, H, W, W_DIM = 2, 4, 8, 16, 16, 32

    root = jax.random.PRNGKey(0)
    kx, kw, kp0, kp1, kn = jax.random.split(root, 5)

    x = jax.random.normal(kx, (B, Cin, H, W), jnp.float32)   # NCHW like PyTorch
    w = jax.random.normal(kw, (B, W_DIM), jnp.float32)

    params0 = init_layer_params(kp0, Cin, Cout, W_DIM)   # layer 0: Cin  -> Cout
    params1 = init_layer_params(kp1, Cout, Cout, W_DIM)  # layer 1: Cout -> Cout

    out = gconv_block(x, w, params0, params1, kn)
    out = jax.block_until_ready(out)
    assert out.shape == (B, Cout, H, W), out.shape
    assert bool(jnp.all(jnp.isfinite(out)))
    print("KERNEL_OK")
</pallas_src>

<mosaic_0001>
module attributes {stable_mosaic.version = 11 : i64} {
  func.func @gconv_block_kernel(%arg0: i32, %arg1: memref<8x512xf32, #tpu.memory_space<vmem>>, %arg2: memref<8x72xbf16, #tpu.memory_space<vmem>>, %arg3: memref<8x1xf32, #tpu.memory_space<vmem>>, %arg4: memref<8x1xf32, #tpu.memory_space<vmem>>, %arg5: memref<8x512xf32, #tpu.memory_space<vmem>>, %arg6: memref<1x8x2xf32, #tpu.memory_space<vmem>>, %arg7: memref<1x8x2xf32, #tpu.memory_space<vmem>>, %arg8: memref<8x72xbf16, #tpu.memory_space<vmem>>, %arg9: memref<8x1xf32, #tpu.memory_space<vmem>>, %arg10: memref<8x1xf32, #tpu.memory_space<vmem>>, %arg11: memref<8x512xf32, #tpu.memory_space<vmem>>, %arg12: memref<1x8x2xf32, #tpu.memory_space<vmem>>, %arg13: memref<1x8x2xf32, #tpu.memory_space<vmem>>, %arg14: memref<8x512xf32, #tpu.memory_space<vmem>>) attributes {dimension_semantics = [#tpu.dimension_semantics<parallel>], iteration_bounds = array<i64: 1>, scalar_prefetch = 0 : i64, scratch_operands = 0 : i64, tpu.core_type = #tpu.core_type<tc>, window_params = [{transform_indices = @transform_0, window_bounds = array<i64: 8, 512>}, {pipeline_mode = #tpu.pipeline_mode<synchronous>, transform_indices = @transform_1, window_bounds = array<i64: 8, 72>}, {pipeline_mode = #tpu.pipeline_mode<synchronous>, transform_indices = @transform_2, window_bounds = array<i64: 8, 1>}, {pipeline_mode = #tpu.pipeline_mode<synchronous>, transform_indices = @transform_3, window_bounds = array<i64: 8, 1>}, {transform_indices = @transform_4, window_bounds = array<i64: 8, 512>}, {transform_indices = @transform_5, window_bounds = array<i64: 1, 8, 2>}, {transform_indices = @transform_6, window_bounds = array<i64: 1, 8, 2>}, {pipeline_mode = #tpu.pipeline_mode<synchronous>, transform_indices = @transform_7, window_bounds = array<i64: 8, 72>}, {pipeline_mode = #tpu.pipeline_mode<synchronous>, transform_indices = @transform_8, window_bounds = array<i64: 8, 1>}, {pipeline_mode = #tpu.pipeline_mode<synchronous>, transform_indices = @transform_9, window_bounds = array<i64: 8, 1>}, {transform_indices = @transform_10, window_bounds = array<i64: 8, 512>}, {transform_indices = @transform_11, window_bounds = array<i64: 1, 8, 2>}, {transform_indices = @transform_12, window_bounds = array<i64: 1, 8, 2>}, {transform_indices = @transform_13, window_bounds = array<i64: 8, 512>}]} {
    %0 = tpu.iota {dimensions = array<i32: 1>} : vector<1x512xi32>
    %c15_i32 = arith.constant 15 : i32
    %1 = vector.broadcast %c15_i32 : i32 to vector<1x512xi32>
    %2 = arith.andi %0, %1 : vector<1x512xi32>
    %c4_i32 = arith.constant 4 : i32
    %3 = vector.broadcast %c4_i32 : i32 to vector<1x512xi32>
    %4 = arith.shrsi %0, %3 : vector<1x512xi32>
    %c15_i32_0 = arith.constant 15 : i32
    %5 = vector.broadcast %c15_i32_0 : i32 to vector<1x512xi32>
    %6 = arith.andi %4, %5 : vector<1x512xi32>
    %c-1_i32 = arith.constant -1 : i32
    %7 = vector.broadcast %c-1_i32 : i32 to vector<1x512xi32>
    %8 = arith.addi %6, %7 : vector<1x512xi32>
    %c0_i32 = arith.constant 0 : i32
    %9 = vector.broadcast %c0_i32 : i32 to vector<1x512xi32>
    %10 = arith.cmpi sge, %8, %9 : vector<1x512xi32>
    %c-1_i32_1 = arith.constant -1 : i32
    %11 = vector.broadcast %c-1_i32_1 : i32 to vector<1x512xi32>
    %12 = arith.addi %6, %11 : vector<1x512xi32>
    %c16_i32 = arith.constant 16 : i32
    %13 = vector.broadcast %c16_i32 : i32 to vector<1x512xi32>
    %14 = arith.cmpi slt, %12, %13 : vector<1x512xi32>
    %15 = arith.andi %10, %14 : vector<1x512xi1>
    %c0_i32_2 = arith.constant 0 : i32
    %16 = vector.broadcast %c0_i32_2 : i32 to vector<1x512xi32>
    %17 = arith.addi %6, %16 : vector<1x512xi32>
    %c0_i32_3 = arith.constant 0 : i32
    %18 = vector.broadcast %c0_i32_3 : i32 to vector<1x512xi32>
    %19 = arith.cmpi sge, %17, %18 : vector<1x512xi32>
    %c0_i32_4 = arith.constant 0 : i32
    %20 = vector.broadcast %c0_i32_4 : i32 to vector<1x512xi32>
    %21 = arith.addi %6, %20 : vector<1x512xi32>
    %c16_i32_5 = arith.constant 16 : i32
    %22 = vector.broadcast %c16_i32_5 : i32 to vector<1x512xi32>
    %23 = arith.cmpi slt, %21, %22 : vector<1x512xi32>
    %24 = arith.andi %19, %23 : vector<1x512xi1>
    %c1_i32 = arith.constant 1 : i32
    %25 = vector.broadcast %c1_i32 : i32 to vector<1x512xi32>
    %26 = arith.addi %6, %25 : vector<1x512xi32>
    %c0_i32_6 = arith.constant 0 : i32
    %27 = vector.broadcast %c0_i32_6 : i32 to vector<1x512xi32>
    %28 = arith.cmpi sge, %26, %27 : vector<1x512xi32>
    %c1_i32_7 = arith.constant 1 : i32
    %29 = vector.broadcast %c1_i32_7 : i32 to vector<1x512xi32>
    %30 = arith.addi %6, %29 : vector<1x512xi32>
    %c16_i32_8 = arith.constant 16 : i32
    %31 = vector.broadcast %c16_i32_8 : i32 to vector<1x512xi32>
    %32 = arith.cmpi slt, %30, %31 : vector<1x512xi32>
    %33 = arith.andi %28, %32 : vector<1x512xi1>
    %c-1_i32_9 = arith.constant -1 : i32
    %34 = vector.broadcast %c-1_i32_9 : i32 to vector<1x512xi32>
    %35 = arith.addi %2, %34 : vector<1x512xi32>
    %c0_i32_10 = arith.constant 0 : i32
    %36 = vector.broadcast %c0_i32_10 : i32 to vector<1x512xi32>
    %37 = arith.cmpi sge, %35, %36 : vector<1x512xi32>
    %c-1_i32_11 = arith.constant -1 : i32
    %38 = vector.broadcast %c-1_i32_11 : i32 to vector<1x512xi32>
    %39 = arith.addi %2, %38 : vector<1x512xi32>
    %c16_i32_12 = arith.constant 16 : i32
    %40 = vector.broadcast %c16_i32_12 : i32 to vector<1x512xi32>
    %41 = arith.cmpi slt, %39, %40 : vector<1x512xi32>
    %42 = arith.andi %37, %41 : vector<1x512xi1>
    %c0_i32_13 = arith.constant 0 : i32
    %43 = vector.broadcast %c0_i32_13 : i32 to vector<1x512xi32>
    %44 = arith.addi %2, %43 : vector<1x512xi32>
    %c0_i32_14 = arith.constant 0 : i32
    %45 = vector.broadcast %c0_i32_14 : i32 to vector<1x512xi32>
    %46 = arith.cmpi sge, %44, %45 : vector<1x512xi32>
    %c0_i32_15 = arith.constant 0 : i32
    %47 = vector.broadcast %c0_i32_15 : i32 to vector<1x512xi32>
    %48 = arith.addi %2, %47 : vector<1x512xi32>
    %c16_i32_16 = arith.constant 16 : i32
    %49 = vector.broadcast %c16_i32_16 : i32 to vector<1x512xi32>
    %50 = arith.cmpi slt, %48, %49 : vector<1x512xi32>
    %51 = arith.andi %46, %50 : vector<1x512xi1>
    %c1_i32_17 = arith.constant 1 : i32
    %52 = vector.broadcast %c1_i32_17 : i32 to vector<1x512xi32>
    %53 = arith.addi %2, %52 : vector<1x512xi32>
    %c0_i32_18 = arith.constant 0 : i32
    %54 = vector.broadcast %c0_i32_18 : i32 to vector<1x512xi32>
    %55 = arith.cmpi sge, %53, %54 : vector<1x512xi32>
    %c1_i32_19 = arith.constant 1 : i32
    %56 = vector.broadcast %c1_i32_19 : i32 to vector<1x512xi32>
    %57 = arith.addi %2, %56 : vector<1x512xi32>
    %c16_i32_20 = arith.constant 16 : i32
    %58 = vector.broadcast %c16_i32_20 : i32 to vector<1x512xi32>
    %59 = arith.cmpi slt, %57, %58 : vector<1x512xi32>
    %60 = arith.andi %55, %59 : vector<1x512xi1>
    %61 = arith.andi %15, %42 : vector<1x512xi1>
    %62 = arith.andi %15, %51 : vector<1x512xi1>
    %63 = arith.andi %15, %60 : vector<1x512xi1>
    %64 = arith.andi %24, %42 : vector<1x512xi1>
    %65 = arith.andi %24, %51 : vector<1x512xi1>
    %66 = arith.andi %24, %60 : vector<1x512xi1>
    %67 = arith.andi %33, %42 : vector<1x512xi1>
    %68 = arith.andi %33, %51 : vector<1x512xi1>
    %69 = arith.andi %33, %60 : vector<1x512xi1>
    %c8_i32 = arith.constant 8 : i32
    %70 = vector.broadcast %c8_i32 : i32 to vector<1x512xi32>
    %71 = arith.shrsi %0, %70 : vector<1x512xi32>
    %c0_i32_21 = arith.constant 0 : i32
    %72 = vector.broadcast %c0_i32_21 : i32 to vector<1x512xi32>
    %73 = arith.cmpi eq, %71, %72 : vector<1x512xi32>
    %c1_i32_22 = arith.constant 1 : i32
    %74 = vector.broadcast %c1_i32_22 : i32 to vector<1x512xi32>
    %75 = arith.cmpi eq, %71, %74 : vector<1x512xi32>
    %c0 = arith.constant 0 : index
    %c0_23 = arith.constant 0 : index
    %76 = vector.load %arg1[%c0, %c0_23] : memref<8x512xf32, #tpu.memory_space<vmem>>, vector<8x512xf32>
    %77 = vector.extract_strided_slice %76 {offsets = [0, 495], sizes = [8, 17], strides = [1, 1]} : vector<8x512xf32> to vector<8x17xf32>
    %78 = vector.extract_strided_slice %76 {offsets = [0, 0], sizes = [8, 495], strides = [1, 1]} : vector<8x512xf32> to vector<8x495xf32>
    %79 = tpu.concatenate %77, %78 in 1 : vector<8x17xf32>, vector<8x495xf32> -> vector<8x512xf32>
    %cst = arith.constant 0.000000e+00 : f32
    %80 = vector.shape_cast %61 : vector<1x512xi1> to vector<1x512xi1>
    %81 = vector.broadcast %80 : vector<1x512xi1> to vector<8x512xi1>
    %82 = vector.broadcast %cst : f32 to vector<8x512xf32>
    %83 = arith.select %81, %79, %82 : vector<8x512xi1>, vector<8x512xf32>
    %84 = vector.extract_strided_slice %76 {offsets = [0, 496], sizes = [8, 16], strides = [1, 1]} : vector<8x512xf32> to vector<8x16xf32>
    %85 = vector.extract_strided_slice %76 {offsets = [0, 0], sizes = [8, 496], strides = [1, 1]} : vector<8x512xf32> to vector<8x496xf32>
    %86 = tpu.concatenate %84, %85 in 1 : vector<8x16xf32>, vector<8x496xf32> -> vector<8x512xf32>
    %cst_24 = arith.constant 0.000000e+00 : f32
    %87 = vector.shape_cast %62 : vector<1x512xi1> to vector<1x512xi1>
    %88 = vector.broadcast %87 : vector<1x512xi1> to vector<8x512xi1>
    %89 = vector.broadcast %cst_24 : f32 to vector<8x512xf32>
    %90 = arith.select %88, %86, %89 : vector<8x512xi1>, vector<8x512xf32>
    %91 = vector.extract_strided_slice %76 {offsets = [0, 497], sizes = [8, 15], strides = [1, 1]} : vector<8x512xf32> to vector<8x15xf32>
    %92 = vector.extract_strided_slice %76 {offsets = [0, 0], sizes = [8, 497], strides = [1, 1]} : vector<8x512xf32> to vector<8x497xf32>
    %93 = tpu.concatenate %91, %92 in 1 : vector<8x15xf32>, vector<8x497xf32> -> vector<8x512xf32>
    %cst_25 = arith.constant 0.000000e+00 : f32
    %94 = vector.shape_cast %63 : vector<1x512xi1> to vector<1x512xi1>
    %95 = vector.broadcast %94 : vector<1x512xi1> to vector<8x512xi1>
    %96 = vector.broadcast %cst_25 : f32 to vector<8x512xf32>
    %97 = arith.select %95, %93, %96 : vector<8x512xi1>, vector<8x512xf32>
    %98 = vector.extract_strided_slice %76 {offsets = [0, 511], sizes = [8, 1], strides = [1, 1]} : vector<8x512xf32> to vector<8x1xf32>
    %99 = vector.extract_strided_slice %76 {offsets = [0, 0], sizes = [8, 511], strides = [1, 1]} : vector<8x512xf32> to vector<8x511xf32>
    %100 = tpu.concatenate %98, %99 in 1 : vector<8x1xf32>, vector<8x511xf32> -> vector<8x512xf32>
    %cst_26 = arith.constant 0.000000e+00 : f32
    %101 = vector.shape_cast %64 : vector<1x512xi1> to vector<1x512xi1>
    %102 = vector.broadcast %101 : vector<1x512xi1> to vector<8x512xi1>
    %103 = vector.broadcast %cst_26 : f32 to vector<8x512xf32>
    %104 = arith.select %102, %100, %103 : vector<8x512xi1>, vector<8x512xf32>
    %cst_27 = arith.constant 0.000000e+00 : f32
    %105 = vector.shape_cast %65 : vector<1x512xi1> to vector<1x512xi1>
    %106 = vector.broadcast %105 : vector<1x512xi1> to vector<8x512xi1>
    %107 = vector.broadcast %cst_27 : f32 to vector<8x512xf32>
    %108 = arith.select %106, %76, %107 : vector<8x512xi1>, vector<8x512xf32>
    %109 = vector.extract_strided_slice %76 {offsets = [0, 1], sizes = [8, 511], strides = [1, 1]} : vector<8x512xf32> to vector<8x511xf32>
    %110 = vector.extract_strided_slice %76 {offsets = [0, 0], sizes = [8, 1], strides = [1, 1]} : vector<8x512xf32> to vector<8x1xf32>
    %111 = tpu.concatenate %109, %110 in 1 : vector<8x511xf32>, vector<8x1xf32> -> vector<8x512xf32>
    %cst_28 = arith.constant 0.000000e+00 : f32
    %112 = vector.shape_cast %66 : vector<1x512xi1> to vector<1x512xi1>
    %113 = vector.broadcast %112 : vector<1x512xi1> to vector<8x512xi1>
    %114 = vector.broadcast %cst_28 : f32 to vector<8x512xf32>
    %115 = arith.select %113, %111, %114 : vector<8x512xi1>, vector<8x512xf32>
    %116 = vector.extract_strided_slice %76 {offsets = [0, 15], sizes = [8, 497], strides = [1, 1]} : vector<8x512xf32> to vector<8x497xf32>
    %117 = vector.extract_strided_slice %76 {offsets = [0, 0], sizes = [8, 15], strides = [1, 1]} : vector<8x512xf32> to vector<8x15xf32>
    %118 = tpu.concatenate %116, %117 in 1 : vector<8x497xf32>, vector<8x15xf32> -> vector<8x512xf32>
    %cst_29 = arith.constant 0.000000e+00 : f32
    %119 = vector.shape_cast %67 : vector<1x512xi1> to vector<1x512xi1>
    %120 = vector.broadcast %119 : vector<1x512xi1> to vector<8x512xi1>
    %121 = vector.broadcast %cst_29 : f32 to vector<8x512xf32>
    %122 = arith.select %120, %118, %121 : vector<8x512xi1>, vector<8x512xf32>
    %123 = vector.extract_strided_slice %76 {offsets = [0, 16], sizes = [8, 496], strides = [1, 1]} : vector<8x512xf32> to vector<8x496xf32>
    %124 = vector.extract_strided_slice %76 {offsets = [0, 0], sizes = [8, 16], strides = [1, 1]} : vector<8x512xf32> to vector<8x16xf32>
    %125 = tpu.concatenate %123, %124 in 1 : vector<8x496xf32>, vector<8x16xf32> -> vector<8x512xf32>
    %cst_30 = arith.constant 0.000000e+00 : f32
    %126 = vector.shape_cast %68 : vector<1x512xi1> to vector<1x512xi1>
    %127 = vector.broadcast %126 : vector<1x512xi1> to vector<8x512xi1>
    %128 = vector.broadcast %cst_30 : f32 to vector<8x512xf32>
    %129 = arith.select %127, %125, %128 : vector<8x512xi1>, vector<8x512xf32>
    %130 = vector.extract_strided_slice %76 {offsets = [0, 17], sizes = [8, 495], strides = [1, 1]} : vector<8x512xf32> to vector<8x495xf32>
    %131 = vector.extract_strided_slice %76 {offsets = [0, 0], sizes = [8, 17], strides = [1, 1]} : vector<8x512xf32> to vector<8x17xf32>
    %132 = tpu.concatenate %130, %131 in 1 : vector<8x495xf32>, vector<8x17xf32> -> vector<8x512xf32>
    %cst_31 = arith.constant 0.000000e+00 : f32
    %133 = vector.shape_cast %69 : vector<1x512xi1> to vector<1x512xi1>
    %134 = vector.broadcast %133 : vector<1x512xi1> to vector<8x512xi1>
    %135 = vector.broadcast %cst_31 : f32 to vector<8x512xf32>
    %136 = arith.select %134, %132, %135 : vector<8x512xi1>, vector<8x512xf32>
    %137 = tpu.concatenate %83, %90, %97, %104, %108, %115, %122, %129, %136 in 0 : vector<8x512xf32>, vector<8x512xf32>, vector<8x512xf32>, vector<8x512xf32>, vector<8x512xf32>, vector<8x512xf32>, vector<8x512xf32>, vector<8x512xf32>, vector<8x512xf32> -> vector<72x512xf32>
    %138 = arith.truncf %137 : vector<72x512xf32> to vector<72x512xbf16>
    %c0_32 = arith.constant 0 : index
    %c0_33 = arith.constant 0 : index
    %139 = vector.load %arg2[%c0_32, %c0_33] : memref<8x72xbf16, #tpu.memory_space<vmem>>, vector<8x72xbf16>
    %cst_34 = arith.constant dense<0.000000e+00> : vector<8x512xf32>
    %140 = tpu.matmul %139, %138, %cst_34 {dimension_numbers = #tpu.dot_dimension_numbers<[1], [0], [0], [1], [0, 0, 1, 1], [], []>} : vector<8x72xbf16>, vector<72x512xbf16>, vector<8x512xf32> -> vector<8x512xf32>
    %c0_35 = arith.constant 0 : index
    %c0_36 = arith.constant 0 : index
    %141 = vector.load %arg3[%c0_35, %c0_36] : memref<8x1xf32, #tpu.memory_space<vmem>>, vector<8x1xf32>
    %142 = vector.broadcast %141 : vector<8x1xf32> to vector<8x512xf32>
    %143 = arith.addf %140, %142 : vector<8x512xf32>
    %c0_37 = arith.constant 0 : index
    %c0_38 = arith.constant 0 : index
    %144 = vector.load %arg5[%c0_37, %c0_38] : memref<8x512xf32, #tpu.memory_space<vmem>>, vector<8x512xf32>
    %c0_39 = arith.constant 0 : index
    %c0_40 = arith.constant 0 : index
    %145 = vector.load %arg4[%c0_39, %c0_40] : memref<8x1xf32, #tpu.memory_space<vmem>>, vector<8x1xf32>
    %146 = vector.broadcast %145 : vector<8x1xf32> to vector<8x512xf32>
    %147 = arith.mulf %144, %146 : vector<8x512xf32>
    %148 = arith.addf %143, %147 : vector<8x512xf32>
    %c0_41 = arith.constant 0 : index
    %c0_42 = arith.constant 0 : index
    %c0_43 = arith.constant 0 : index
    %149 = vector.load %arg6[%c0_41, %c0_42, %c0_43] : memref<1x8x2xf32, #tpu.memory_space<vmem>>, vector<1x8x2xf32>
    %150 = vector.shape_cast %149 : vector<1x8x2xf32> to vector<8x2xf32>
    %c0_44 = arith.constant 0 : index
    %c0_45 = arith.constant 0 : index
    %c0_46 = arith.constant 0 : index
    %151 = vector.load %arg7[%c0_44, %c0_45, %c0_46] : memref<1x8x2xf32, #tpu.memory_space<vmem>>, vector<1x8x2xf32>
    %152 = vector.shape_cast %151 : vector<1x8x2xf32> to vector<8x2xf32>
    %cst_47 = arith.constant 0.000000e+00 : f32
    %153 = vector.broadcast %cst_47 : f32 to vector<8x512xf32>
    %cst_48 = arith.constant 0.000000e+00 : f32
    %154 = vector.shape_cast %73 : vector<1x512xi1> to vector<1x512xi1>
    %155 = vector.broadcast %154 : vector<1x512xi1> to vector<8x512xi1>
    %156 = vector.broadcast %cst_48 : f32 to vector<8x512xf32>
    %157 = arith.select %155, %148, %156 : vector<8x512xi1>, vector<8x512xf32>
    %cst_49 = arith.constant dense<0.000000e+00> : vector<8xf32>
    %158 = vector.multi_reduction <add>, %157, %cst_49 [1] : vector<8x512xf32> to vector<8xf32>
    %159 = vector.shape_cast %158 : vector<8xf32> to vector<8x1xf32>
    %cst_50 = arith.constant 3.906250e-03 : f32
    %160 = vector.broadcast %cst_50 : f32 to vector<8x1xf32>
    %161 = arith.mulf %159, %160 : vector<8x1xf32>
    %162 = vector.shape_cast %73 : vector<1x512xi1> to vector<1x512xi1>
    %163 = vector.broadcast %162 : vector<1x512xi1> to vector<8x512xi1>
    %164 = vector.shape_cast %161 : vector<8x1xf32> to vector<8x1xf32>
    %165 = vector.broadcast %164 : vector<8x1xf32> to vector<8x512xf32>
    %166 = arith.select %163, %165, %153 : vector<8x512xi1>, vector<8x512xf32>
    %cst_51 = arith.constant 0.000000e+00 : f32
    %167 = vector.shape_cast %75 : vector<1x512xi1> to vector<1x512xi1>
    %168 = vector.broadcast %167 : vector<1x512xi1> to vector<8x512xi1>
    %169 = vector.broadcast %cst_51 : f32 to vector<8x512xf32>
    %170 = arith.select %168, %148, %169 : vector<8x512xi1>, vector<8x512xf32>
    %cst_52 = arith.constant dense<0.000000e+00> : vector<8xf32>
    %171 = vector.multi_reduction <add>, %170, %cst_52 [1] : vector<8x512xf32> to vector<8xf32>
    %172 = vector.shape_cast %171 : vector<8xf32> to vector<8x1xf32>
    %cst_53 = arith.constant 3.906250e-03 : f32
    %173 = vector.broadcast %cst_53 : f32 to vector<8x1xf32>
    %174 = arith.mulf %172, %173 : vector<8x1xf32>
    %175 = vector.shape_cast %75 : vector<1x512xi1> to vector<1x512xi1>
    %176 = vector.broadcast %175 : vector<1x512xi1> to vector<8x512xi1>
    %177 = vector.shape_cast %174 : vector<8x1xf32> to vector<8x1xf32>
    %178 = vector.broadcast %177 : vector<8x1xf32> to vector<8x512xf32>
    %179 = arith.select %176, %178, %166 : vector<8x512xi1>, vector<8x512xf32>
    %180 = arith.subf %148, %179 : vector<8x512xf32>
    %181 = arith.mulf %180, %180 : vector<8x512xf32>
    %cst_54 = arith.constant 0.000000e+00 : f32
    %182 = vector.broadcast %cst_54 : f32 to vector<8x512xf32>
    %cst_55 = arith.constant 0.000000e+00 : f32
    %183 = vector.shape_cast %73 : vector<1x512xi1> to vector<1x512xi1>
    %184 = vector.broadcast %183 : vector<1x512xi1> to vector<8x512xi1>
    %185 = vector.broadcast %cst_55 : f32 to vector<8x512xf32>
    %186 = arith.select %184, %181, %185 : vector<8x512xi1>, vector<8x512xf32>
    %cst_56 = arith.constant dense<0.000000e+00> : vector<8xf32>
    %187 = vector.multi_reduction <add>, %186, %cst_56 [1] : vector<8x512xf32> to vector<8xf32>
    %188 = vector.shape_cast %187 : vector<8xf32> to vector<8x1xf32>
    %cst_57 = arith.constant 0.00392156886 : f32
    %189 = vector.broadcast %cst_57 : f32 to vector<8x1xf32>
    %190 = arith.mulf %188, %189 : vector<8x1xf32>
    %cst_58 = arith.constant 9.99999993E-9 : f32
    %191 = vector.broadcast %cst_58 : f32 to vector<8x1xf32>
    %192 = arith.addf %190, %191 : vector<8x1xf32>
    %193 = vector.extract_strided_slice %150 {offsets = [0, 0], sizes = [8, 1], strides = [1, 1]} : vector<8x2xf32> to vector<8x1xf32>
    %194 = math.rsqrt %192 : vector<8x1xf32>
    %195 = arith.mulf %193, %194 : vector<8x1xf32>
    %196 = vector.broadcast %195 : vector<8x1xf32> to vector<8x512xf32>
    %197 = arith.mulf %180, %196 : vector<8x512xf32>
    %198 = vector.extract_strided_slice %152 {offsets = [0, 0], sizes = [8, 1], strides = [1, 1]} : vector<8x2xf32> to vector<8x1xf32>
    %199 = vector.broadcast %198 : vector<8x1xf32> to vector<8x512xf32>
    %200 = arith.addf %197, %199 : vector<8x512xf32>
    %201 = vector.shape_cast %73 : vector<1x512xi1> to vector<1x512xi1>
    %202 = vector.broadcast %201 : vector<1x512xi1> to vector<8x512xi1>
    %203 = arith.select %202, %200, %182 : vector<8x512xi1>, vector<8x512xf32>
    %cst_59 = arith.constant 0.000000e+00 : f32
    %204 = vector.shape_cast %75 : vector<1x512xi1> to vector<1x512xi1>
    %205 = vector.broadcast %204 : vector<1x512xi1> to vector<8x512xi1>
    %206 = vector.broadcast %cst_59 : f32 to vector<8x512xf32>
    %207 = arith.select %205, %181, %206 : vector<8x512xi1>, vector<8x512xf32>
    %cst_60 = arith.constant dense<0.000000e+00> : vector<8xf32>
    %208 = vector.multi_reduction <add>, %207, %cst_60 [1] : vector<8x512xf32> to vector<8xf32>
    %209 = vector.shape_cast %208 : vector<8xf32> to vector<8x1xf32>
    %cst_61 = arith.constant 0.00392156886 : f32
    %210 = vector.broadcast %cst_61 : f32 to vector<8x1xf32>
    %211 = arith.mulf %209, %210 : vector<8x1xf32>
    %cst_62 = arith.constant 9.99999993E-9 : f32
    %212 = vector.broadcast %cst_62 : f32 to vector<8x1xf32>
    %213 = arith.addf %211, %212 : vector<8x1xf32>
    %214 = vector.extract_strided_slice %150 {offsets = [0, 1], sizes = [8, 1], strides = [1, 1]} : vector<8x2xf32> to vector<8x1xf32>
    %215 = math.rsqrt %213 : vector<8x1xf32>
    %216 = arith.mulf %214, %215 : vector<8x1xf32>
    %217 = vector.broadcast %216 : vector<8x1xf32> to vector<8x512xf32>
    %218 = arith.mulf %180, %217 : vector<8x512xf32>
    %219 = vector.extract_strided_slice %152 {offsets = [0, 1], sizes = [8, 1], strides = [1, 1]} : vector<8x2xf32> to vector<8x1xf32>
    %220 = vector.broadcast %219 : vector<8x1xf32> to vector<8x512xf32>
    %221 = arith.addf %218, %220 : vector<8x512xf32>
    %222 = vector.shape_cast %75 : vector<1x512xi1> to vector<1x512xi1>
    %223 = vector.broadcast %222 : vector<1x512xi1> to vector<8x512xi1>
    %224 = arith.select %223, %221, %203 : vector<8x512xi1>, vector<8x512xf32>
    %cst_63 = arith.constant 0.000000e+00 : f32
    %225 = vector.broadcast %cst_63 : f32 to vector<8x512xf32>
    %226 = arith.cmpf oge, %224, %225 : vector<8x512xf32>
    %cst_64 = arith.constant 2.000000e-01 : f32
    %227 = vector.broadcast %cst_64 : f32 to vector<8x512xf32>
    %228 = arith.mulf %227, %224 : vector<8x512xf32>
    %229 = arith.select %226, %224, %228 : vector<8x512xi1>, vector<8x512xf32>
    %230 = vector.extract_strided_slice %229 {offsets = [0, 495], sizes = [8, 17], strides = [1, 1]} : vector<8x512xf32> to vector<8x17xf32>
    %231 = vector.extract_strided_slice %229 {offsets = [0, 0], sizes = [8, 495], strides = [1, 1]} : vector<8x512xf32> to vector<8x495xf32>
    %232 = tpu.concatenate %230, %231 in 1 : vector<8x17xf32>, vector<8x495xf32> -> vector<8x512xf32>
    %cst_65 = arith.constant 0.000000e+00 : f32
    %233 = vector.shape_cast %61 : vector<1x512xi1> to vector<1x512xi1>
    %234 = vector.broadcast %233 : vector<1x512xi1> to vector<8x512xi1>
    %235 = vector.broadcast %cst_65 : f32 to vector<8x512xf32>
    %236 = arith.select %234, %232, %235 : vector<8x512xi1>, vector<8x512xf32>
    %237 = vector.extract_strided_slice %229 {offsets = [0, 496], sizes = [8, 16], strides = [1, 1]} : vector<8x512xf32> to vector<8x16xf32>
    %238 = vector.extract_strided_slice %229 {offsets = [0, 0], sizes = [8, 496], strides = [1, 1]} : vector<8x512xf32> to vector<8x496xf32>
    %239 = tpu.concatenate %237, %238 in 1 : vector<8x16xf32>, vector<8x496xf32> -> vector<8x512xf32>
    %cst_66 = arith.constant 0.000000e+00 : f32
    %240 = vector.shape_cast %62 : vector<1x512xi1> to vector<1x512xi1>
    %241 = vector.broadcast %240 : vector<1x512xi1> to vector<8x512xi1>
    %242 = vector.broadcast %cst_66 : f32 to vector<8x512xf32>
    %243 = arith.select %241, %239, %242 : vector<8x512xi1>, vector<8x512xf32>
    %244 = vector.extract_strided_slice %229 {offsets = [0, 497], sizes = [8, 15], strides = [1, 1]} : vector<8x512xf32> to vector<8x15xf32>
    %245 = vector.extract_strided_slice %229 {offsets = [0, 0], sizes = [8, 497], strides = [1, 1]} : vector<8x512xf32> to vector<8x497xf32>
    %246 = tpu.concatenate %244, %245 in 1 : vector<8x15xf32>, vector<8x497xf32> -> vector<8x512xf32>
    %cst_67 = arith.constant 0.000000e+00 : f32
    %247 = vector.shape_cast %63 : vector<1x512xi1> to vector<1x512xi1>
    %248 = vector.broadcast %247 : vector<1x512xi1> to vector<8x512xi1>
    %249 = vector.broadcast %cst_67 : f32 to vector<8x512xf32>
    %250 = arith.select %248, %246, %249 : vector<8x512xi1>, vector<8x512xf32>
    %251 = vector.extract_strided_slice %229 {offsets = [0, 511], sizes = [8, 1], strides = [1, 1]} : vector<8x512xf32> to vector<8x1xf32>
    %252 = vector.extract_strided_slice %229 {offsets = [0, 0], sizes = [8, 511], strides = [1, 1]} : vector<8x512xf32> to vector<8x511xf32>
    %253 = tpu.concatenate %251, %252 in 1 : vector<8x1xf32>, vector<8x511xf32> -> vector<8x512xf32>
    %cst_68 = arith.constant 0.000000e+00 : f32
    %254 = vector.shape_cast %64 : vector<1x512xi1> to vector<1x512xi1>
    %255 = vector.broadcast %254 : vector<1x512xi1> to vector<8x512xi1>
    %256 = vector.broadcast %cst_68 : f32 to vector<8x512xf32>
    %257 = arith.select %255, %253, %256 : vector<8x512xi1>, vector<8x512xf32>
    %cst_69 = arith.constant 0.000000e+00 : f32
    %258 = vector.shape_cast %65 : vector<1x512xi1> to vector<1x512xi1>
    %259 = vector.broadcast %258 : vector<1x512xi1> to vector<8x512xi1>
    %260 = vector.broadcast %cst_69 : f32 to vector<8x512xf32>
    %261 = arith.select %259, %229, %260 : vector<8x512xi1>, vector<8x512xf32>
    %262 = vector.extract_strided_slice %229 {offsets = [0, 1], sizes = [8, 511], strides = [1, 1]} : vector<8x512xf32> to vector<8x511xf32>
    %263 = vector.extract_strided_slice %229 {offsets = [0, 0], sizes = [8, 1], strides = [1, 1]} : vector<8x512xf32> to vector<8x1xf32>
    %264 = tpu.concatenate %262, %263 in 1 : vector<8x511xf32>, vector<8x1xf32> -> vector<8x512xf32>
    %cst_70 = arith.constant 0.000000e+00 : f32
    %265 = vector.shape_cast %66 : vector<1x512xi1> to vector<1x512xi1>
    %266 = vector.broadcast %265 : vector<1x512xi1> to vector<8x512xi1>
    %267 = vector.broadcast %cst_70 : f32 to vector<8x512xf32>
    %268 = arith.select %266, %264, %267 : vector<8x512xi1>, vector<8x512xf32>
    %269 = vector.extract_strided_slice %229 {offsets = [0, 15], sizes = [8, 497], strides = [1, 1]} : vector<8x512xf32> to vector<8x497xf32>
    %270 = vector.extract_strided_slice %229 {offsets = [0, 0], sizes = [8, 15], strides = [1, 1]} : vector<8x512xf32> to vector<8x15xf32>
    %271 = tpu.concatenate %269, %270 in 1 : vector<8x497xf32>, vector<8x15xf32> -> vector<8x512xf32>
    %cst_71 = arith.constant 0.000000e+00 : f32
    %272 = vector.shape_cast %67 : vector<1x512xi1> to vector<1x512xi1>
    %273 = vector.broadcast %272 : vector<1x512xi1> to vector<8x512xi1>
    %274 = vector.broadcast %cst_71 : f32 to vector<8x512xf32>
    %275 = arith.select %273, %271, %274 : vector<8x512xi1>, vector<8x512xf32>
    %276 = vector.extract_strided_slice %229 {offsets = [0, 16], sizes = [8, 496], strides = [1, 1]} : vector<8x512xf32> to vector<8x496xf32>
    %277 = vector.extract_strided_slice %229 {offsets = [0, 0], sizes = [8, 16], strides = [1, 1]} : vector<8x512xf32> to vector<8x16xf32>
    %278 = tpu.concatenate %276, %277 in 1 : vector<8x496xf32>, vector<8x16xf32> -> vector<8x512xf32>
    %cst_72 = arith.constant 0.000000e+00 : f32
    %279 = vector.shape_cast %68 : vector<1x512xi1> to vector<1x512xi1>
    %280 = vector.broadcast %279 : vector<1x512xi1> to vector<8x512xi1>
    %281 = vector.broadcast %cst_72 : f32 to vector<8x512xf32>
    %282 = arith.select %280, %278, %281 : vector<8x512xi1>, vector<8x512xf32>
    %283 = vector.extract_strided_slice %229 {offsets = [0, 17], sizes = [8, 495], strides = [1, 1]} : vector<8x512xf32> to vector<8x495xf32>
    %284 = vector.extract_strided_slice %229 {offsets = [0, 0], sizes = [8, 17], strides = [1, 1]} : vector<8x512xf32> to vector<8x17xf32>
    %285 = tpu.concatenate %283, %284 in 1 : vector<8x495xf32>, vector<8x17xf32> -> vector<8x512xf32>
    %cst_73 = arith.constant 0.000000e+00 : f32
    %286 = vector.shape_cast %69 : vector<1x512xi1> to vector<1x512xi1>
    %287 = vector.broadcast %286 : vector<1x512xi1> to vector<8x512xi1>
    %288 = vector.broadcast %cst_73 : f32 to vector<8x512xf32>
    %289 = arith.select %287, %285, %288 : vector<8x512xi1>, vector<8x512xf32>
    %290 = tpu.concatenate %236, %243, %250, %257, %261, %268, %275, %282, %289 in 0 : vector<8x512xf32>, vector<8x512xf32>, vector<8x512xf32>, vector<8x512xf32>, vector<8x512xf32>, vector<8x512xf32>, vector<8x512xf32>, vector<8x512xf32>, vector<8x512xf32> -> vector<72x512xf32>
    %291 = arith.truncf %290 : vector<72x512xf32> to vector<72x512xbf16>
    %c0_74 = arith.constant 0 : index
    %c0_75 = arith.constant 0 : index
    %292 = vector.load %arg8[%c0_74, %c0_75] : memref<8x72xbf16, #tpu.memory_space<vmem>>, vector<8x72xbf16>
    %cst_76 = arith.constant dense<0.000000e+00> : vector<8x512xf32>
    %293 = tpu.matmul %292, %291, %cst_76 {dimension_numbers = #tpu.dot_dimension_numbers<[1], [0], [0], [1], [0, 0, 1, 1], [], []>} : vector<8x72xbf16>, vector<72x512xbf16>, vector<8x512xf32> -> vector<8x512xf32>
    %c0_77 = arith.constant 0 : index
    %c0_78 = arith.constant 0 : index
    %294 = vector.load %arg9[%c0_77, %c0_78] : memref<8x1xf32, #tpu.memory_space<vmem>>, vector<8x1xf32>
    %295 = vector.broadcast %294 : vector<8x1xf32> to vector<8x512xf32>
    %296 = arith.addf %293, %295 : vector<8x512xf32>
    %c0_79 = arith.constant 0 : index
    %c0_80 = arith.constant 0 : index
    %297 = vector.load %arg11[%c0_79, %c0_80] : memref<8x512xf32, #tpu.memory_space<vmem>>, vector<8x512xf32>
    %c0_81 = arith.constant 0 : index
    %c0_82 = arith.constant 0 : index
    %298 = vector.load %arg10[%c0_81, %c0_82] : memref<8x1xf32, #tpu.memory_space<vmem>>, vector<8x1xf32>
    %299 = vector.broadcast %298 : vector<8x1xf32> to vector<8x512xf32>
    %300 = arith.mulf %297, %299 : vector<8x512xf32>
    %301 = arith.addf %296, %300 : vector<8x512xf32>
    %c0_83 = arith.constant 0 : index
    %c0_84 = arith.constant 0 : index
    %c0_85 = arith.constant 0 : index
    %302 = vector.load %arg12[%c0_83, %c0_84, %c0_85] : memref<1x8x2xf32, #tpu.memory_space<vmem>>, vector<1x8x2xf32>
    %303 = vector.shape_cast %302 : vector<1x8x2xf32> to vector<8x2xf32>
    %c0_86 = arith.constant 0 : index
    %c0_87 = arith.constant 0 : index
    %c0_88 = arith.constant 0 : index
    %304 = vector.load %arg13[%c0_86, %c0_87, %c0_88] : memref<1x8x2xf32, #tpu.memory_space<vmem>>, vector<1x8x2xf32>
    %305 = vector.shape_cast %304 : vector<1x8x2xf32> to vector<8x2xf32>
    %cst_89 = arith.constant 0.000000e+00 : f32
    %306 = vector.broadcast %cst_89 : f32 to vector<8x512xf32>
    %cst_90 = arith.constant 0.000000e+00 : f32
    %307 = vector.shape_cast %73 : vector<1x512xi1> to vector<1x512xi1>
    %308 = vector.broadcast %307 : vector<1x512xi1> to vector<8x512xi1>
    %309 = vector.broadcast %cst_90 : f32 to vector<8x512xf32>
    %310 = arith.select %308, %301, %309 : vector<8x512xi1>, vector<8x512xf32>
    %cst_91 = arith.constant dense<0.000000e+00> : vector<8xf32>
    %311 = vector.multi_reduction <add>, %310, %cst_91 [1] : vector<8x512xf32> to vector<8xf32>
    %312 = vector.shape_cast %311 : vector<8xf32> to vector<8x1xf32>
    %cst_92 = arith.constant 3.906250e-03 : f32
    %313 = vector.broadcast %cst_92 : f32 to vector<8x1xf32>
    %314 = arith.mulf %312, %313 : vector<8x1xf32>
    %315 = vector.shape_cast %73 : vector<1x512xi1> to vector<1x512xi1>
    %316 = vector.broadcast %315 : vector<1x512xi1> to vector<8x512xi1>
    %317 = vector.shape_cast %314 : vector<8x1xf32> to vector<8x1xf32>
    %318 = vector.broadcast %317 : vector<8x1xf32> to vector<8x512xf32>
    %319 = arith.select %316, %318, %306 : vector<8x512xi1>, vector<8x512xf32>
    %cst_93 = arith.constant 0.000000e+00 : f32
    %320 = vector.shape_cast %75 : vector<1x512xi1> to vector<1x512xi1>
    %321 = vector.broadcast %320 : vector<1x512xi1> to vector<8x512xi1>
    %322 = vector.broadcast %cst_93 : f32 to vector<8x512xf32>
    %323 = arith.select %321, %301, %322 : vector<8x512xi1>, vector<8x512xf32>
    %cst_94 = arith.constant dense<0.000000e+00> : vector<8xf32>
    %324 = vector.multi_reduction <add>, %323, %cst_94 [1] : vector<8x512xf32> to vector<8xf32>
    %325 = vector.shape_cast %324 : vector<8xf32> to vector<8x1xf32>
    %cst_95 = arith.constant 3.906250e-03 : f32
    %326 = vector.broadcast %cst_95 : f32 to vector<8x1xf32>
    %327 = arith.mulf %325, %326 : vector<8x1xf32>
    %328 = vector.shape_cast %75 : vector<1x512xi1> to vector<1x512xi1>
    %329 = vector.broadcast %328 : vector<1x512xi1> to vector<8x512xi1>
    %330 = vector.shape_cast %327 : vector<8x1xf32> to vector<8x1xf32>
    %331 = vector.broadcast %330 : vector<8x1xf32> to vector<8x512xf32>
    %332 = arith.select %329, %331, %319 : vector<8x512xi1>, vector<8x512xf32>
    %333 = arith.subf %301, %332 : vector<8x512xf32>
    %334 = arith.mulf %333, %333 : vector<8x512xf32>
    %cst_96 = arith.constant 0.000000e+00 : f32
    %335 = vector.broadcast %cst_96 : f32 to vector<8x512xf32>
    %cst_97 = arith.constant 0.000000e+00 : f32
    %336 = vector.shape_cast %73 : vector<1x512xi1> to vector<1x512xi1>
    %337 = vector.broadcast %336 : vector<1x512xi1> to vector<8x512xi1>
    %338 = vector.broadcast %cst_97 : f32 to vector<8x512xf32>
    %339 = arith.select %337, %334, %338 : vector<8x512xi1>, vector<8x512xf32>
    %cst_98 = arith.constant dense<0.000000e+00> : vector<8xf32>
    %340 = vector.multi_reduction <add>, %339, %cst_98 [1] : vector<8x512xf32> to vector<8xf32>
    %341 = vector.shape_cast %340 : vector<8xf32> to vector<8x1xf32>
    %cst_99 = arith.constant 0.00392156886 : f32
    %342 = vector.broadcast %cst_99 : f32 to vector<8x1xf32>
    %343 = arith.mulf %341, %342 : vector<8x1xf32>
    %cst_100 = arith.constant 9.99999993E-9 : f32
    %344 = vector.broadcast %cst_100 : f32 to vector<8x1xf32>
    %345 = arith.addf %343, %344 : vector<8x1xf32>
    %346 = vector.extract_strided_slice %303 {offsets = [0, 0], sizes = [8, 1], strides = [1, 1]} : vector<8x2xf32> to vector<8x1xf32>
    %347 = math.rsqrt %345 : vector<8x1xf32>
    %348 = arith.mulf %346, %347 : vector<8x1xf32>
    %349 = vector.broadcast %348 : vector<8x1xf32> to vector<8x512xf32>
    %350 = arith.mulf %333, %349 : vector<8x512xf32>
    %351 = vector.extract_strided_slice %305 {offsets = [0, 0], sizes = [8, 1], strides = [1, 1]} : vector<8x2xf32> to vector<8x1xf32>
    %352 = vector.broadcast %351 : vector<8x1xf32> to vector<8x512xf32>
    %353 = arith.addf %350, %352 : vector<8x512xf32>
    %354 = vector.shape_cast %73 : vector<1x512xi1> to vector<1x512xi1>
    %355 = vector.broadcast %354 : vector<1x512xi1> to vector<8x512xi1>
    %356 = arith.select %355, %353, %335 : vector<8x512xi1>, vector<8x512xf32>
    %cst_101 = arith.constant 0.000000e+00 : f32
    %357 = vector.shape_cast %75 : vector<1x512xi1> to vector<1x512xi1>
    %358 = vector.broadcast %357 : vector<1x512xi1> to vector<8x512xi1>
    %359 = vector.broadcast %cst_101 : f32 to vector<8x512xf32>
    %360 = arith.select %358, %334, %359 : vector<8x512xi1>, vector<8x512xf32>
    %cst_102 = arith.constant dense<0.000000e+00> : vector<8xf32>
    %361 = vector.multi_reduction <add>, %360, %cst_102 [1] : vector<8x512xf32> to vector<8xf32>
    %362 = vector.shape_cast %361 : vector<8xf32> to vector<8x1xf32>
    %cst_103 = arith.constant 0.00392156886 : f32
    %363 = vector.broadcast %cst_103 : f32 to vector<8x1xf32>
    %364 = arith.mulf %362, %363 : vector<8x1xf32>
    %cst_104 = arith.constant 9.99999993E-9 : f32
    %365 = vector.broadcast %cst_104 : f32 to vector<8x1xf32>
    %366 = arith.addf %364, %365 : vector<8x1xf32>
    %367 = vector.extract_strided_slice %303 {offsets = [0, 1], sizes = [8, 1], strides = [1, 1]} : vector<8x2xf32> to vector<8x1xf32>
    %368 = math.rsqrt %366 : vector<8x1xf32>
    %369 = arith.mulf %367, %368 : vector<8x1xf32>
    %370 = vector.broadcast %369 : vector<8x1xf32> to vector<8x512xf32>
    %371 = arith.mulf %333, %370 : vector<8x512xf32>
    %372 = vector.extract_strided_slice %305 {offsets = [0, 1], sizes = [8, 1], strides = [1, 1]} : vector<8x2xf32> to vector<8x1xf32>
    %373 = vector.broadcast %372 : vector<8x1xf32> to vector<8x512xf32>
    %374 = arith.addf %371, %373 : vector<8x512xf32>
    %375 = vector.shape_cast %75 : vector<1x512xi1> to vector<1x512xi1>
    %376 = vector.broadcast %375 : vector<1x512xi1> to vector<8x512xi1>
    %377 = arith.select %376, %374, %356 : vector<8x512xi1>, vector<8x512xf32>
    %cst_105 = arith.constant 0.000000e+00 : f32
    %378 = vector.broadcast %cst_105 : f32 to vector<8x512xf32>
    %379 = arith.cmpf oge, %377, %378 : vector<8x512xf32>
    %cst_106 = arith.constant 2.000000e-01 : f32
    %380 = vector.broadcast %cst_106 : f32 to vector<8x512xf32>
    %381 = arith.mulf %380, %377 : vector<8x512xf32>
    %382 = arith.select %379, %377, %381 : vector<8x512xi1>, vector<8x512xf32>
    %c0_107 = arith.constant 0 : index
    %c0_108 = arith.constant 0 : index
    %383 = vector.load %arg14[%c0_107, %c0_108] : memref<8x512xf32, #tpu.memory_space<vmem>>, vector<8x512xf32>
    tpu.vector_store %arg14[%c0_107, %c0_108], %382 {strides = array<i32>} : memref<8x512xf32, #tpu.memory_space<vmem>>, vector<8x512xf32>,
    return
  }
  func.func @transform_0(%arg0: i32) -> (i32, i32) {
    %c0_i32 = arith.constant 0 : i32
    %c0_i32_0 = arith.constant 0 : i32
    return %c0_i32, %arg0 : i32, i32
  }
  func.func @transform_1(%arg0: i32) -> (i32, i32) {
    %c0_i32 = arith.constant 0 : i32
    %c0_i32_0 = arith.constant 0 : i32
    %c0_i32_1 = arith.constant 0 : i32
    return %c0_i32, %c0_i32_0 : i32, i32
  }
  func.func @transform_2(%arg0: i32) -> (i32, i32) {
    %c0_i32 = arith.constant 0 : i32
    %c0_i32_0 = arith.constant 0 : i32
    %c0_i32_1 = arith.constant 0 : i32
    return %c0_i32, %c0_i32_0 : i32, i32
  }
  func.func @transform_3(%arg0: i32) -> (i32, i32) {
    %c0_i32 = arith.constant 0 : i32
    %c0_i32_0 = arith.constant 0 : i32
    %c0_i32_1 = arith.constant 0 : i32
    return %c0_i32, %c0_i32_0 : i32, i32
  }
  func.func @transform_4(%arg0: i32) -> (i32, i32) {
    %c0_i32 = arith.constant 0 : i32
    %c0_i32_0 = arith.constant 0 : i32
    return %c0_i32, %arg0 : i32, i32
  }
  func.func @transform_5(%arg0: i32) -> (i32, i32, i32) {
    %c0_i32 = arith.constant 0 : i32
    %c0_i32_0 = arith.constant 0 : i32
    %c0_i32_1 = arith.constant 0 : i32
    return %arg0, %c0_i32, %c0_i32_0 : i32, i32, i32
  }
  func.func @transform_6(%arg0: i32) -> (i32, i32, i32) {
    %c0_i32 = arith.constant 0 : i32
    %c0_i32_0 = arith.constant 0 : i32
    %c0_i32_1 = arith.constant 0 : i32
    return %arg0, %c0_i32, %c0_i32_0 : i32, i32, i32
  }
  func.func @transform_7(%arg0: i32) -> (i32, i32) {
    %c0_i32 = arith.constant 0 : i32
    %c0_i32_0 = arith.constant 0 : i32
    %c0_i32_1 = arith.constant 0 : i32
    return %c0_i32, %c0_i32_0 : i32, i32
  }
  func.func @transform_8(%arg0: i32) -> (i32, i32) {
    %c0_i32 = arith.constant 0 : i32
    %c0_i32_0 = arith.constant 0 : i32
    %c0_i32_1 = arith.constant 0 : i32
    return %c0_i32, %c0_i32_0 : i32, i32
  }
  func.func @transform_9(%arg0: i32) -> (i32, i32) {
    %c0_i32 = arith.constant 0 : i32
    %c0_i32_0 = arith.constant 0 : i32
    %c0_i32_1 = arith.constant 0 : i32
    return %c0_i32, %c0_i32_0 : i32, i32
  }
  func.func @transform_10(%arg0: i32) -> (i32, i32) {
    %c0_i32 = arith.constant 0 : i32
    %c0_i32_0 = arith.constant 0 : i32
    return %c0_i32, %arg0 : i32, i32
  }
  func.func @transform_11(%arg0: i32) -> (i32, i32, i32) {
    %c0_i32 = arith.constant 0 : i32
    %c0_i32_0 = arith.constant 0 : i32
    %c0_i32_1 = arith.constant 0 : i32
    return %arg0, %c0_i32, %c0_i32_0 : i32, i32, i32
  }
  func.func @transform_12(%arg0: i32) -> (i32, i32, i32) {
    %c0_i32 = arith.constant 0 : i32
    %c0_i32_0 = arith.constant 0 : i32
    %c0_i32_1 = arith.constant 0 : i32
    return %arg0, %c0_i32, %c0_i32_0 : i32, i32, i32
  }
  func.func @transform_13(%arg0: i32) -> (i32, i32) {
    %c0_i32 = arith.constant 0 : i32
    %c0_i32_0 = arith.constant 0 : i32
    return %c0_i32, %arg0 : i32, i32
  }
}

</mosaic_0001>

<llo_original>
// kernel: gconv_block.3
$region0: #{gconv_block.3}
  #allocation0 [shape = 'u32[]', space=smem, size = 0x4, offset = 0x4, fixed_abs, tag = 'smem constant byte address 0x4 - core index']
  #allocation1 [shape = 'u32[144,128]{1,0:T(1,128)}', space=vmem, size = 0x12000, scoped, tag = 'internal scratch']
  %s0 = inlined_call_operand.hbm [shape: f32[8,512], index: 0, kind: input, shape index: {}]
  %s1 = inlined_call_operand.hbm [shape: bf16[8,72], index: 1, kind: input, shape index: {}]
  %s2 = inlined_call_operand.hbm [shape: f32[8,1], index: 2, kind: input, shape index: {}]
  %s3 = inlined_call_operand.hbm [shape: f32[8,1], index: 3, kind: input, shape index: {}]
  %s4 = inlined_call_operand.hbm [shape: f32[8,512], index: 4, kind: input, shape index: {}]
  %s5 = inlined_call_operand.hbm [shape: f32[1,8,2], index: 5, kind: input, shape index: {}]
  %s6 = inlined_call_operand.hbm [shape: f32[1,8,2], index: 6, kind: input, shape index: {}]
  %s7 = inlined_call_operand.hbm [shape: bf16[8,72], index: 7, kind: input, shape index: {}]
  %s8 = inlined_call_operand.hbm [shape: f32[8,1], index: 8, kind: input, shape index: {}]
  %s9 = inlined_call_operand.hbm [shape: f32[8,1], index: 9, kind: input, shape index: {}]
  %s10 = inlined_call_operand.hbm [shape: f32[8,512], index: 10, kind: input, shape index: {}]
  %s11 = inlined_call_operand.hbm [shape: f32[1,8,2], index: 11, kind: input, shape index: {}]
  %s12 = inlined_call_operand.hbm [shape: f32[1,8,2], index: 12, kind: input, shape index: {}]
  %s13 = inlined_call_operand.hbm [shape: f32[8,512], index: 13, kind: output, shape index: {}]
  %s14 = sld [smem:[#allocation0]]
  $region114: #{gconv_block.3} parent=0
    _
  %s16 = ssub.s32 1, %s14
  %s17 = scalar_select 0, %s16, %s14
  $region1: #{gconv_block.3} parent=0
    #allocation2 [shape = 'u8[16384]{0}', space=vmem, size = 0x4000, scoped, tag = 'input window, operand 0, single buffered']
    #allocation3 [shape = 's32[1]{0}', space=sflag, size = 0x4, scoped, tag = 'scoped memory for gconv_block.3']
    #allocation4 [shape = 's32[1]{0}', space=sflag, size = 0x4, scoped, tag = 'scoped memory for gconv_block.3']
    #allocation5 [shape = 'u8[2048]{0}', space=vmem, size = 0x800, scoped, tag = 'input window, operand 1, single buffered']
    #allocation6 [shape = 's32[1]{0}', space=sflag, size = 0x4, scoped, tag = 'scoped memory for gconv_block.3']
    #allocation7 [shape = 'u8[4096]{0}', space=vmem, size = 0x1000, scoped, tag = 'input window, operand 2, single buffered']
    #allocation8 [shape = 'u8[4096]{0}', space=vmem, size = 0x1000, scoped, tag = 'input window, operand 3, single buffered']
    #allocation9 [shape = 's32[1]{0}', space=sflag, size = 0x4, scoped, tag = 'scoped memory for gconv_block.3']
    #allocation10 [shape = 'u8[16384]{0}', space=vmem, size = 0x4000, scoped, tag = 'input window, operand 4, single buffered']
    #allocation11 [shape = 'u8[4096]{0}', space=vmem, size = 0x1000, scoped, tag = 'input window, operand 5, single buffered']
    #allocation12 [shape = 's32[1]{0}', space=sflag, size = 0x4, scoped, tag = 'scoped memory for gconv_block.3']
    #allocation13 [shape = 'u8[4096]{0}', space=vmem, size = 0x1000, scoped, tag = 'input window, operand 6, single buffered']
    #allocation14 [shape = 'u8[2048]{0}', space=vmem, size = 0x800, scoped, tag = 'input window, operand 7, single buffered']
    #allocation15 [shape = 's32[1]{0}', space=sflag, size = 0x4, scoped, tag = 'scoped memory for gconv_block.3']
    #allocation16 [shape = 'u8[4096]{0}', space=vmem, size = 0x1000, scoped, tag = 'input window, operand 8, single buffered']
    #allocation17 [shape = 'u8[4096]{0}', space=vmem, size = 0x1000, scoped, tag = 'input window, operand 9, single buffered']
    #allocation18 [shape = 's32[1]{0}', space=sflag, size = 0x4, scoped, tag = 'scoped memory for gconv_block.3']
    #allocation19 [shape = 'u8[16384]{0}', space=vmem, size = 0x4000, scoped, tag = 'input window, operand 10, single buffered']
    #allocation20 [shape = 'u8[4096]{0}', space=vmem, size = 0x1000, scoped, tag = 'input window, operand 11, single buffered']
    #allocation21 [shape = 's32[1]{0}', space=sflag, size = 0x4, scoped, tag = 'scoped memory for gconv_block.3']
    #allocation22 [shape = 'u8[4096]{0}', space=vmem, size = 0x1000, scoped, tag = 'input window, operand 12, single buffered']
    #allocation23 [shape = 'u8[16384]{0}', space=vmem, size = 0x4000, scoped, tag = 'output window, operand 0, single buffered']
    %18 = vsyncpa [#allocation3], 0
    %19 = vsyncpa [#allocation6], 0
    %20 = vsyncpa [#allocation9], 0
    %21 = vsyncpa [#allocation12], 0
    %22 = vsyncpa [#allocation15], 0
    %23 = vsyncpa [#allocation18], 0
    %24 = vsyncpa [#allocation21], 0
    %25 = vsyncpa [#allocation4], 0
    // Predicated region
    $region2: #{gconv_block.3} parent=1 // pred_check
      _
    $region3: #{gconv_block.3} parent=1 // pred_check_branch
      %27 = sbr.rel (0) target = $region5
    $region4: #{gconv_block.3} parent=1 // pred_region
      %s29 = ssub.s32 512, 512
      %30 = vsyncadd [#allocation3], %s29
      %s32 = sshll.u32 [#allocation2], 4
      %s33 = int_to_ptr.vmem [resolvable:$true] %s32
      %35 = dma.hbm_to_vmem [thread:$0]  %s0, 512, %s33, [#allocation3]
    $region5: #{gconv_block.3} parent=1 // pred_fallthru
      _
    // Predicated region
    $region6: #{gconv_block.3} parent=1 // pred_check
      _
    $region7: #{gconv_block.3} parent=1 // pred_check_branch
      %37 = sbr.rel (0) target = $region9
    $region8: #{gconv_block.3} parent=1 // pred_region
      %s39 = ssub.s32 64, 64
      %40 = vsyncadd [#allocation6], %s39
      %s42 = sshll.u32 [#allocation5], 4
      %s43 = int_to_ptr.vmem [resolvable:$true] %s42
      %45 = dma.hbm_to_vmem [thread:$0]  %s1, 64, %s43, [#allocation6]
    $region9: #{gconv_block.3} parent=1 // pred_fallthru
      _
    // Predicated region
    $region10: #{gconv_block.3} parent=1 // pred_check
      _
    $region11: #{gconv_block.3} parent=1 // pred_check_branch
      %47 = sbr.rel (0) target = $region13
    $region12: #{gconv_block.3} parent=1 // pred_region
      %s49 = ssub.s32 128, 128
      %50 = vsyncadd [#allocation6], %s49
      %s52 = sshll.u32 [#allocation7], 4
      %s53 = int_to_ptr.vmem [resolvable:$true] %s52
      %55 = dma.hbm_to_vmem [thread:$0]  %s2, 128, %s53, [#allocation6]
    $region13: #{gconv_block.3} parent=1 // pred_fallthru
      _
    // Predicated region
    $region14: #{gconv_block.3} parent=1 // pred_check
      _
    $region15: #{gconv_block.3} parent=1 // pred_check_branch
      %57 = sbr.rel (0) target = $region17
    $region16: #{gconv_block.3} parent=1 // pred_region
      %s59 = ssub.s32 128, 128
      %60 = vsyncadd [#allocation9], %s59
      %s62 = sshll.u32 [#allocation8], 4
      %s63 = int_to_ptr.vmem [resolvable:$true] %s62
      %65 = dma.hbm_to_vmem [thread:$0]  %s3, 128, %s63, [#allocation9]
    $region17: #{gconv_block.3} parent=1 // pred_fallthru
      _
    // Predicated region
    $region18: #{gconv_block.3} parent=1 // pred_check
      _
    $region19: #{gconv_block.3} parent=1 // pred_check_branch
      %67 = sbr.rel (0) target = $region21
    $region20: #{gconv_block.3} parent=1 // pred_region
      %s69 = ssub.s32 512, 512
      %70 = vsyncadd [#allocation9], %s69
      %s72 = sshll.u32 [#allocation10], 4
      %s73 = int_to_ptr.vmem [resolvable:$true] %s72
      %75 = dma.hbm_to_vmem [thread:$0]  %s4, 512, %s73, [#allocation9]
    $region21: #{gconv_block.3} parent=1 // pred_fallthru
      _
    // Predicated region
    $region22: #{gconv_block.3} parent=1 // pred_check
      _
    $region23: #{gconv_block.3} parent=1 // pred_check_branch
      %77 = sbr.rel (0) target = $region25
    $region24: #{gconv_block.3} parent=1 // pred_region
      %s79 = ssub.s32 128, 128
      %80 = vsyncadd [#allocation12], %s79
      %s82 = sshll.u32 [#allocation11], 4
      %s83 = int_to_ptr.vmem [resolvable:$true] %s82
      %85 = dma.hbm_to_vmem [thread:$0]  %s5, 128, %s83, [#allocation12]
    $region25: #{gconv_block.3} parent=1 // pred_fallthru
      _
    // Predicated region
    $region26: #{gconv_block.3} parent=1 // pred_check
      _
    $region27: #{gconv_block.3} parent=1 // pred_check_branch
      %87 = sbr.rel (0) target = $region29
    $region28: #{gconv_block.3} parent=1 // pred_region
      %s89 = ssub.s32 128, 128
      %90 = vsyncadd [#allocation12], %s89
      %s92 = sshll.u32 [#allocation13], 4
      %s93 = int_to_ptr.vmem [resolvable:$true] %s92
      %95 = dma.hbm_to_vmem [thread:$0]  %s6, 128, %s93, [#allocation12]
    $region29: #{gconv_block.3} parent=1 // pred_fallthru
      _
    // Predicated region
    $region30: #{gconv_block.3} parent=1 // pred_check
      _
    $region31: #{gconv_block.3} parent=1 // pred_check_branch
      %97 = sbr.rel (0) target = $region33
    $region32: #{gconv_block.3} parent=1 // pred_region
      %s99 = ssub.s32 64, 64
      %100 = vsyncadd [#allocation15], %s99
      %s102 = sshll.u32 [#allocation14], 4
      %s103 = int_to_ptr.vmem [resolvable:$true] %s102
      %105 = dma.hbm_to_vmem [thread:$0]  %s7, 64, %s103, [#allocation15]
    $region33: #{gconv_block.3} parent=1 // pred_fallthru
      _
    // Predicated region
    $region34: #{gconv_block.3} parent=1 // pred_check
      _
    $region35: #{gconv_block.3} parent=1 // pred_check_branch
      %107 = sbr.rel (0) target = $region37
    $region36: #{gconv_block.3} parent=1 // pred_region
      %s109 = ssub.s32 128, 128
      %110 = vsyncadd [#allocation15], %s109
      %s112 = sshll.u32 [#allocation16], 4
      %s113 = int_to_ptr.vmem [resolvable:$true] %s112
      %115 = dma.hbm_to_vmem [thread:$0]  %s8, 128, %s113, [#allocation15]
    $region37: #{gconv_block.3} parent=1 // pred_fallthru
      _
    // Predicated region
    $region38: #{gconv_block.3} parent=1 // pred_check
      _
    $region39: #{gconv_block.3} parent=1 // pred_check_branch
      %117 = sbr.rel (0) target = $region41
    $region40: #{gconv_block.3} parent=1 // pred_region
      %s119 = ssub.s32 128, 128
      %120 = vsyncadd [#allocation18], %s119
      %s122 = sshll.u32 [#allocation17], 4
      %s123 = int_to_ptr.vmem [resolvable:$true] %s122
      %125 = dma.hbm_to_vmem [thread:$0]  %s9, 128, %s123, [#allocation18]
    $region41: #{gconv_block.3} parent=1 // pred_fallthru
      _
    // Predicated region
    $region42: #{gconv_block.3} parent=1 // pred_check
      _
    $region43: #{gconv_block.3} parent=1 // pred_check_branch
      %127 = sbr.rel (0) target = $region45
    $region44: #{gconv_block.3} parent=1 // pred_region
      %s129 = ssub.s32 512, 512
      %130 = vsyncadd [#allocation18], %s129
      %s132 = sshll.u32 [#allocation19], 4
      %s133 = int_to_ptr.vmem [resolvable:$true] %s132
      %135 = dma.hbm_to_vmem [thread:$0]  %s10, 512, %s133, [#allocation18]
    $region45: #{gconv_block.3} parent=1 // pred_fallthru
      _
    // Predicated region
    $region46: #{gconv_block.3} parent=1 // pred_check
      _
    $region47: #{gconv_block.3} parent=1 // pred_check_branch
      %137 = sbr.rel (0) target = $region49
    $region48: #{gconv_block.3} parent=1 // pred_region
      %s139 = ssub.s32 128, 128
      %140 = vsyncadd [#allocation21], %s139
      %s142 = sshll.u32 [#allocation20], 4
      %s143 = int_to_ptr.vmem [resolvable:$true] %s142
      %145 = dma.hbm_to_vmem [thread:$0]  %s11, 128, %s143, [#allocation21]
    $region49: #{gconv_block.3} parent=1 // pred_fallthru
      _
    // Predicated region
    $region50: #{gconv_block.3} parent=1 // pred_check
      _
    $region51: #{gconv_block.3} parent=1 // pred_check_branch
      %147 = sbr.rel (0) target = $region53
    $region52: #{gconv_block.3} parent=1 // pred_region
      %s149 = ssub.s32 128, 128
      %150 = vsyncadd [#allocation21], %s149
      %s152 = sshll.u32 [#allocation22], 4
      %s153 = int_to_ptr.vmem [resolvable:$true] %s152
      %155 = dma.hbm_to_vmem [thread:$0]  %s12, 128, %s153, [#allocation21]
    $region53: #{gconv_block.3} parent=1 // pred_fallthru
      _
    // Predicated region
    $region54: #{gconv_block.3} parent=1 // pred_check
      _
    $region55: #{gconv_block.3} parent=1 // pred_check_branch
      %157 = sbr.rel (0) target = $region57
    $region56: #{gconv_block.3} parent=1 // pred_region
      %158 = dma.done [#allocation3], 512
    $region57: #{gconv_block.3} parent=1 // pred_fallthru
      _
    // Predicated region
    $region58: #{gconv_block.3} parent=1 // pred_check
      _
    $region59: #{gconv_block.3} parent=1 // pred_check_branch
      %160 = sbr.rel (0) target = $region61
    $region60: #{gconv_block.3} parent=1 // pred_region
      %161 = dma.done [#allocation6], 64
    $region61: #{gconv_block.3} parent=1 // pred_fallthru
      _
    // Predicated region
    $region62: #{gconv_block.3} parent=1 // pred_check
      _
    $region63: #{gconv_block.3} parent=1 // pred_check_branch
      %163 = sbr.rel (0) target = $region65
    $region64: #{gconv_block.3} parent=1 // pred_region
      %164 = dma.done [#allocation6], 128
    $region65: #{gconv_block.3} parent=1 // pred_fallthru
      _
    // Predicated region
    $region66: #{gconv_block.3} parent=1 // pred_check
      _
    $region67: #{gconv_block.3} parent=1 // pred_check_branch
      %166 = sbr.rel (0) target = $region69
    $region68: #{gconv_block.3} parent=1 // pred_region
      %167 = dma.done [#allocation9], 128
    $region69: #{gconv_block.3} parent=1 // pred_fallthru
      _
    // Predicated region
    $region70: #{gconv_block.3} parent=1 // pred_check
      _
    $region71: #{gconv_block.3} parent=1 // pred_check_branch
      %169 = sbr.rel (0) target = $region73
    $region72: #{gconv_block.3} parent=1 // pred_region
      %170 = dma.done [#allocation9], 512
    $region73: #{gconv_block.3} parent=1 // pred_fallthru
      _
    // Predicated region
    $region74: #{gconv_block.3} parent=1 // pred_check
      _
    $region75: #{gconv_block.3} parent=1 // pred_check_branch
      %172 = sbr.rel (0) target = $region77
    $region76: #{gconv_block.3} parent=1 // pred_region
      %173 = dma.done [#allocation12], 128
    $region77: #{gconv_block.3} parent=1 // pred_fallthru
      _
    // Predicated region
    $region78: #{gconv_block.3} parent=1 // pred_check
      _
    $region79: #{gconv_block.3} parent=1 // pred_check_branch
      %175 = sbr.rel (0) target = $region81
    $region80: #{gconv_block.3} parent=1 // pred_region
      %176 = dma.done [#allocation12], 128
    $region81: #{gconv_block.3} parent=1 // pred_fallthru
      _
    // Predicated region
    $region82: #{gconv_block.3} parent=1 // pred_check
      _
    $region83: #{gconv_block.3} parent=1 // pred_check_branch
      %178 = sbr.rel (0) target = $region85
    $region84: #{gconv_block.3} parent=1 // pred_region
      %179 = dma.done [#allocation15], 64
    $region85: #{gconv_block.3} parent=1 // pred_fallthru
      _
    // Predicated region
    $region86: #{gconv_block.3} parent=1 // pred_check
      _
    $region87: #{gconv_block.3} parent=1 // pred_check_branch
      %181 = sbr.rel (0) target = $region89
    $region88: #{gconv_block.3} parent=1 // pred_region
      %182 = dma.done [#allocation15], 128
    $region89: #{gconv_block.3} parent=1 // pred_fallthru
      _
    // Predicated region
    $region90: #{gconv_block.3} parent=1 // pred_check
      _
    $region91: #{gconv_block.3} parent=1 // pred_check_branch
      %184 = sbr.rel (0) target = $region93
    $region92: #{gconv_block.3} parent=1 // pred_region
      %185 = dma.done [#allocation18], 128
    $region93: #{gconv_block.3} parent=1 // pred_fallthru
      _
    // Predicated region
    $region94: #{gconv_block.3} parent=1 // pred_check
      _
    $region95: #{gconv_block.3} parent=1 // pred_check_branch
      %187 = sbr.rel (0) target = $region97
    $region96: #{gconv_block.3} parent=1 // pred_region
      %188 = dma.done [#allocation18], 512
    $region97: #{gconv_block.3} parent=1 // pred_fallthru
      _
    // Predicated region
    $region98: #{gconv_block.3} parent=1 // pred_check
      _
    $region99: #{gconv_block.3} parent=1 // pred_check_branch
      %190 = sbr.rel (0) target = $region101
    $region100: #{gconv_block.3} parent=1 // pred_region
      %191 = dma.done [#allocation21], 128
    $region101: #{gconv_block.3} parent=1 // pred_fallthru
      _
    // Predicated region
    $region102: #{gconv_block.3} parent=1 // pred_check
      _
    $region103: #{gconv_block.3} parent=1 // pred_check_branch
      %193 = sbr.rel (0) target = $region105
    $region104: #{gconv_block.3} parent=1 // pred_region
      %194 = dma.done [#allocation21], 128
    $region105: #{gconv_block.3} parent=1 // pred_fallthru
      _
    %v196 = vlaneseq
    %v197 = vand.u32 %v196, 127
    %v198 = vadd.s32 %v197, 128
    %v199 = vadd.s32 %v197, 256
    %v200 = vadd.s32 %v197, 384
    %v201 = vand.u32 %v197, 15
    %v202 = vand.u32 %v198, 15
    %v203 = vand.u32 %v199, 15
    %v204 = vand.u32 %v200, 15
    %v205 = vshra.s32 %v197, 4
    %v206 = vshra.s32 %v198, 4
    %v207 = vshra.s32 %v199, 4
    %v208 = vshra.s32 %v200, 4
    %v209 = vand.u32 %v205, 15
    %v210 = vand.u32 %v206, 15
    %v211 = vand.u32 %v207, 15
    %v212 = vand.u32 %v208, 15
    %v213 = vadd.s32 %v209, 4294967295
    %v214 = vadd.s32 %v210, 4294967295
    %v215 = vadd.s32 %v211, 4294967295
    %v216 = vadd.s32 %v212, 4294967295
    %vm217 = vcmp.ge.s32.totalorder %v213, 0
    %vm218 = vcmp.ge.s32.totalorder %v214, 0
    %vm219 = vcmp.ge.s32.totalorder %v215, 0
    %vm220 = vcmp.ge.s32.totalorder %v216, 0
    %vm221 = vcmp.lt.s32.totalorder %v213, 16
    %vm222 = vcmp.lt.s32.totalorder %v214, 16
    %vm223 = vcmp.lt.s32.totalorder %v215, 16
    %vm224 = vcmp.lt.s32.totalorder %v216, 16
    %vm225 = vmand %vm217, %vm221
    %vm226 = vmand %vm218, %vm222
    %vm227 = vmand %vm219, %vm223
    %vm228 = vmand %vm220, %vm224
    %vm229 = vcmp.ge.s32.totalorder %v209, 0
    %vm230 = vcmp.ge.s32.totalorder %v210, 0
    %vm231 = vcmp.ge.s32.totalorder %v211, 0
    %vm232 = vcmp.ge.s32.totalorder %v212, 0
    %vm233 = vcmp.lt.s32.totalorder %v209, 16
    %vm234 = vcmp.lt.s32.totalorder %v210, 16
    %vm235 = vcmp.lt.s32.totalorder %v211, 16
    %vm236 = vcmp.lt.s32.totalorder %v212, 16
    %vm237 = vmand %vm229, %vm233
    %vm238 = vmand %vm230, %vm234
    %vm239 = vmand %vm231, %vm235
    %vm240 = vmand %vm232, %vm236
    %v241 = vadd.s32 %v209, 1
    %v242 = vadd.s32 %v210, 1
    %v243 = vadd.s32 %v211, 1
    %v244 = vadd.s32 %v212, 1
    %vm245 = vcmp.ge.s32.totalorder %v241, 0
    %vm246 = vcmp.ge.s32.totalorder %v242, 0
    %vm247 = vcmp.ge.s32.totalorder %v243, 0
    %vm248 = vcmp.ge.s32.totalorder %v244, 0
    %vm249 = vcmp.lt.s32.totalorder %v241, 16
    %vm250 = vcmp.lt.s32.totalorder %v242, 16
    %vm251 = vcmp.lt.s32.totalorder %v243, 16
    %vm252 = vcmp.lt.s32.totalorder %v244, 16
    %vm253 = vmand %vm245, %vm249
    %vm254 = vmand %vm246, %vm250
    %vm255 = vmand %vm247, %vm251
    %vm256 = vmand %vm248, %vm252
    %v257 = vadd.s32 %v201, 4294967295
    %v258 = vadd.s32 %v202, 4294967295
    %v259 = vadd.s32 %v203, 4294967295
    %v260 = vadd.s32 %v204, 4294967295
    %vm261 = vcmp.ge.s32.totalorder %v257, 0
    %vm262 = vcmp.ge.s32.totalorder %v258, 0
    %vm263 = vcmp.ge.s32.totalorder %v259, 0
    %vm264 = vcmp.ge.s32.totalorder %v260, 0
    %vm265 = vcmp.lt.s32.totalorder %v257, 16
    %vm266 = vcmp.lt.s32.totalorder %v258, 16
    %vm267 = vcmp.lt.s32.totalorder %v259, 16
    %vm268 = vcmp.lt.s32.totalorder %v260, 16
    %vm269 = vmand %vm261, %vm265
    %vm270 = vmand %vm262, %vm266
    %vm271 = vmand %vm263, %vm267
    %vm272 = vmand %vm264, %vm268
    %vm273 = vcmp.ge.s32.totalorder %v201, 0
    %vm274 = vcmp.ge.s32.totalorder %v202, 0
    %vm275 = vcmp.ge.s32.totalorder %v203, 0
    %vm276 = vcmp.ge.s32.totalorder %v204, 0
    %vm277 = vcmp.lt.s32.totalorder %v201, 16
    %vm278 = vcmp.lt.s32.totalorder %v202, 16
    %vm279 = vcmp.lt.s32.totalorder %v203, 16
    %vm280 = vcmp.lt.s32.totalorder %v204, 16
    %vm281 = vmand %vm273, %vm277
    %vm282 = vmand %vm274, %vm278
    %vm283 = vmand %vm275, %vm279
    %vm284 = vmand %vm276, %vm280
    %v285 = vadd.s32 %v201, 1
    %v286 = vadd.s32 %v202, 1
    %v287 = vadd.s32 %v203, 1
    %v288 = vadd.s32 %v204, 1
    %vm289 = vcmp.ge.s32.totalorder %v285, 0
    %vm290 = vcmp.ge.s32.totalorder %v286, 0
    %vm291 = vcmp.ge.s32.totalorder %v287, 0
    %vm292 = vcmp.ge.s32.totalorder %v288, 0
    %vm293 = vcmp.lt.s32.totalorder %v285, 16
    %vm294 = vcmp.lt.s32.totalorder %v286, 16
    %vm295 = vcmp.lt.s32.totalorder %v287, 16
    %vm296 = vcmp.lt.s32.totalorder %v288, 16
    %vm297 = vmand %vm289, %vm293
    %vm298 = vmand %vm290, %vm294
    %vm299 = vmand %vm291, %vm295
    %vm300 = vmand %vm292, %vm296
    %vm301 = vmand %vm225, %vm269
    %vm302 = vmand %vm226, %vm270
    %vm303 = vmand %vm227, %vm271
    %vm304 = vmand %vm228, %vm272
    %vm305 = vmand %vm225, %vm281
    %vm306 = vmand %vm226, %vm282
    %vm307 = vmand %vm227, %vm283
    %vm308 = vmand %vm228, %vm284
    %vm309 = vmand %vm225, %vm297
    %vm310 = vmand %vm226, %vm298
    %vm311 = vmand %vm227, %vm299
    %vm312 = vmand %vm228, %vm300
    %vm313 = vmand %vm237, %vm269
    %vm314 = vmand %vm238, %vm270
    %vm315 = vmand %vm239, %vm271
    %vm316 = vmand %vm240, %vm272
    %vm317 = vmand %vm237, %vm281
    %vm318 = vmand %vm238, %vm282
    %vm319 = vmand %vm239, %vm283
    %vm320 = vmand %vm240, %vm284
    %vm321 = vmand %vm237, %vm297
    %vm322 = vmand %vm238, %vm298
    %vm323 = vmand %vm239, %vm299
    %vm324 = vmand %vm240, %vm300
    %vm325 = vmand %vm253, %vm269
    %vm326 = vmand %vm254, %vm270
    %vm327 = vmand %vm255, %vm271
    %vm328 = vmand %vm256, %vm272
    %vm329 = vmand %vm253, %vm281
    %vm330 = vmand %vm254, %vm282
    %vm331 = vmand %vm255, %vm283
    %vm332 = vmand %vm256, %vm284
    %vm333 = vmand %vm253, %vm297
    %vm334 = vmand %vm254, %vm298
    %vm335 = vmand %vm255, %vm299
    %vm336 = vmand %vm256, %vm300
    %v337 = vshra.s32 %v197, 8
    %v338 = vshra.s32 %v198, 8
    %v339 = vshra.s32 %v199, 8
    %v340 = vshra.s32 %v200, 8
    %vm341 = vcmp.eq.s32.totalorder %v337, 0
    %vm342 = vcmp.eq.s32.totalorder %v338, 0
    %vm343 = vcmp.eq.s32.totalorder %v339, 0
    %vm344 = vcmp.eq.s32.totalorder %v340, 0
    %vm345 = vcmp.eq.s32.totalorder %v337, 1
    %vm346 = vcmp.eq.s32.totalorder %v338, 1
    %vm347 = vcmp.eq.s32.totalorder %v339, 1
    %vm348 = vcmp.eq.s32.totalorder %v340, 1
    %v349 = vld [vmem:[#allocation2] sm:$0xff]
    %v350 = vld [vmem:[#allocation2 + $0x8] sm:$0xff]
    %v351 = vld [vmem:[#allocation2 + $0x10] sm:$0xff]
    %v352 = vld [vmem:[#allocation2 + $0x18] sm:$0xff]
    %354 = vrot.lane.b32.xlu0 %v352, 17
    %v355 = vpop.permute.xlu0 %354
    %360 = vrot.lane.b32.xlu0 %v349, 17
    %v361 = vpop.permute.xlu0 %360
    %362 = vrot.lane.b32.xlu0 %v350, 17
    %v363 = vpop.permute.xlu0 %362
    %364 = vrot.lane.b32.xlu0 %v351, 17
    %v365 = vpop.permute.xlu0 %364
    %vm366 = vcmask 138240
    %v367 = vsel %vm366, %v361, %v363
    %v368 = vsel %vm366, %v363, %v365
    %v369 = vsel %vm366, %v365, %v355
    %v374 = vsel %vm366, %v355, %v361
    %v375 = vsel %vm301, 1, 0
    %v376 = vsel %vm302, 1, 0
    %v377 = vsel %vm303, 1, 0
    %v378 = vsel %vm304, 1, 0
    %vm379 = vcmp.eq.s32.totalorder %v375, 1
    %vm380 = vcmp.eq.s32.totalorder %v376, 1
    %vm381 = vcmp.eq.s32.totalorder %v377, 1
    %vm382 = vcmp.eq.s32.totalorder %v378, 1
    %v383 = vsel %vm379, %v374, 0.0
    %v384 = vsel %vm380, %v367, 0.0
    %v385 = vsel %vm381, %v368, 0.0
    %v386 = vsel %vm382, %v369, 0.0
    %387 = vrot.lane.b32.xlu0 %v352, 16
    %v388 = vpop.permute.xlu0 %387
    %390 = vrot.lane.b32.xlu0 %v349, 16
    %v391 = vpop.permute.xlu0 %390
    %392 = vrot.lane.b32.xlu0 %v350, 16
    %v393 = vpop.permute.xlu0 %392
    %394 = vrot.lane.b32.xlu0 %v351, 16
    %v395 = vpop.permute.xlu0 %394
    %vm396 = vcmask 130048
    %v397 = vsel %vm396, %v391, %v393
    %v398 = vsel %vm396, %v393, %v395
    %v399 = vsel %vm396, %v395, %v388
    %v404 = vsel %vm396, %v388, %v391
    %v405 = vsel %vm305, 1, 0
    %v406 = vsel %vm306, 1, 0
    %v407 = vsel %vm307, 1, 0
    %v408 = vsel %vm308, 1, 0
    %vm409 = vcmp.eq.s32.totalorder %v405, 1
    %vm410 = vcmp.eq.s32.totalorder %v406, 1
    %vm411 = vcmp.eq.s32.totalorder %v407, 1
    %vm412 = vcmp.eq.s32.totalorder %v408, 1
    %v413 = vsel %vm409, %v404, 0.0
    %v414 = vsel %vm410, %v397, 0.0
    %v415 = vsel %vm411, %v398, 0.0
    %v416 = vsel %vm412, %v399, 0.0
    %417 = vrot.lane.b32.xlu0 %v352, 15
    %v418 = vpop.permute.xlu0 %417
    %420 = vrot.lane.b32.xlu0 %v349, 15
    %v421 = vpop.permute.xlu0 %420
    %422 = vrot.lane.b32.xlu0 %v350, 15
    %v423 = vpop.permute.xlu0 %422
    %424 = vrot.lane.b32.xlu0 %v351, 15
    %v425 = vpop.permute.xlu0 %424
    %vm426 = vcmask 121856
    %v427 = vsel %vm426, %v421, %v423
    %v428 = vsel %vm426, %v423, %v425
    %v429 = vsel %vm426, %v425, %v418
    %v434 = vsel %vm426, %v418, %v421
    %v435 = vsel %vm309, 1, 0
    %v436 = vsel %vm310, 1, 0
    %v437 = vsel %vm311, 1, 0
    %v438 = vsel %vm312, 1, 0
    %vm439 = vcmp.eq.s32.totalorder %v435, 1
    %vm440 = vcmp.eq.s32.totalorder %v436, 1
    %vm441 = vcmp.eq.s32.totalorder %v437, 1
    %vm442 = vcmp.eq.s32.totalorder %v438, 1
    %v443 = vsel %vm439, %v434, 0.0
    %v444 = vsel %vm440, %v427, 0.0
    %v445 = vsel %vm441, %v428, 0.0
    %v446 = vsel %vm442, %v429, 0.0
    %447 = vrot.lane.b32.xlu0 %v352, 1
    %v448 = vpop.permute.xlu0 %447
    %450 = vrot.lane.b32.xlu0 %v349, 1
    %v451 = vpop.permute.xlu0 %450
    %452 = vrot.lane.b32.xlu0 %v350, 1
    %v453 = vpop.permute.xlu0 %452
    %454 = vrot.lane.b32.xlu0 %v351, 1
    %v455 = vpop.permute.xlu0 %454
    %vm456 = vcmask 7168
    %v457 = vsel %vm456, %v451, %v453
    %v458 = vsel %vm456, %v453, %v455
    %v459 = vsel %vm456, %v455, %v448
    %v464 = vsel %vm456, %v448, %v451
    %v465 = vsel %vm313, 1, 0
    %v466 = vsel %vm314, 1, 0
    %v467 = vsel %vm315, 1, 0
    %v468 = vsel %vm316, 1, 0
    %vm469 = vcmp.eq.s32.totalorder %v465, 1
    %vm470 = vcmp.eq.s32.totalorder %v466, 1
    %vm471 = vcmp.eq.s32.totalorder %v467, 1
    %vm472 = vcmp.eq.s32.totalorder %v468, 1
    %v473 = vsel %vm469, %v464, 0.0
    %v474 = vsel %vm470, %v457, 0.0
    %v475 = vsel %vm471, %v458, 0.0
    %v476 = vsel %vm472, %v459, 0.0
    %v477 = vsel %vm317, 1, 0
    %v478 = vsel %vm318, 1, 0
    %v479 = vsel %vm319, 1, 0
    %v480 = vsel %vm320, 1, 0
    %vm481 = vcmp.eq.s32.totalorder %v477, 1
    %vm482 = vcmp.eq.s32.totalorder %v478, 1
    %vm483 = vcmp.eq.s32.totalorder %v479, 1
    %vm484 = vcmp.eq.s32.totalorder %v480, 1
    %v485 = vsel %vm481, %v349, 0.0
    %v486 = vsel %vm482, %v350, 0.0
    %v487 = vsel %vm483, %v351, 0.0
    %v488 = vsel %vm484, %v352, 0.0
    %489 = vrot.lane.b32.xlu0 %v349, 127
    %v490 = vpop.permute.xlu0 %489
    %491 = vrot.lane.b32.xlu0 %v350, 127
    %v492 = vpop.permute.xlu0 %491
    %493 = vrot.lane.b32.xlu0 %v351, 127
    %v494 = vpop.permute.xlu0 %493
    %495 = vrot.lane.b32.xlu0 %v352, 127
    %v496 = vpop.permute.xlu0 %495
    %vm497 = vcmask 1039360
    %v498 = vsel %vm497, %v490, %v492
    %v499 = vsel %vm497, %v492, %v494
    %v500 = vsel %vm497, %v494, %v496
    %v506 = vsel %vm497, %v496, %v490
    %v507 = vsel %vm321, 1, 0
    %v508 = vsel %vm322, 1, 0
    %v509 = vsel %vm323, 1, 0
    %v510 = vsel %vm324, 1, 0
    %vm511 = vcmp.eq.s32.totalorder %v507, 1
    %vm512 = vcmp.eq.s32.totalorder %v508, 1
    %vm513 = vcmp.eq.s32.totalorder %v509, 1
    %vm514 = vcmp.eq.s32.totalorder %v510, 1
    %v515 = vsel %vm511, %v498, 0.0
    %v516 = vsel %vm512, %v499, 0.0
    %v517 = vsel %vm513, %v500, 0.0
    %v518 = vsel %vm514, %v506, 0.0
    %519 = vrot.lane.b32.xlu0 %v349, 113
    %v520 = vpop.permute.xlu0 %519
    %521 = vrot.lane.b32.xlu0 %v350, 113
    %v522 = vpop.permute.xlu0 %521
    %523 = vrot.lane.b32.xlu0 %v351, 113
    %v524 = vpop.permute.xlu0 %523
    %525 = vrot.lane.b32.xlu0 %v352, 113
    %v526 = vpop.permute.xlu0 %525
    %vm527 = vcmask 924672
    %v528 = vsel %vm527, %v520, %v522
    %v529 = vsel %vm527, %v522, %v524
    %v530 = vsel %vm527, %v524, %v526
    %v536 = vsel %vm527, %v526, %v520
    %v537 = vsel %vm325, 1, 0
    %v538 = vsel %vm326, 1, 0
    %v539 = vsel %vm327, 1, 0
    %v540 = vsel %vm328, 1, 0
    %vm541 = vcmp.eq.s32.totalorder %v537, 1
    %vm542 = vcmp.eq.s32.totalorder %v538, 1
    %vm543 = vcmp.eq.s32.totalorder %v539, 1
    %vm544 = vcmp.eq.s32.totalorder %v540, 1
    %v545 = vsel %vm541, %v528, 0.0
    %v546 = vsel %vm542, %v529, 0.0
    %v547 = vsel %vm543, %v530, 0.0
    %v548 = vsel %vm544, %v536, 0.0
    %549 = vrot.lane.b32.xlu0 %v349, 112
    %v550 = vpop.permute.xlu0 %549
    %551 = vrot.lane.b32.xlu0 %v350, 112
    %v552 = vpop.permute.xlu0 %551
    %553 = vrot.lane.b32.xlu0 %v351, 112
    %v554 = vpop.permute.xlu0 %553
    %555 = vrot.lane.b32.xlu0 %v352, 112
    %v556 = vpop.permute.xlu0 %555
    %vm557 = vcmask 916480
    %v558 = vsel %vm557, %v550, %v552
    %v559 = vsel %vm557, %v552, %v554
    %v560 = vsel %vm557, %v554, %v556
    %v566 = vsel %vm557, %v556, %v550
    %v567 = vsel %vm329, 1, 0
    %v568 = vsel %vm330, 1, 0
    %v569 = vsel %vm331, 1, 0
    %v570 = vsel %vm332, 1, 0
    %vm571 = vcmp.eq.s32.totalorder %v567, 1
    %vm572 = vcmp.eq.s32.totalorder %v568, 1
    %vm573 = vcmp.eq.s32.totalorder %v569, 1
    %vm574 = vcmp.eq.s32.totalorder %v570, 1
    %v575 = vsel %vm571, %v558, 0.0
    %v576 = vsel %vm572, %v559, 0.0
    %v577 = vsel %vm573, %v560, 0.0
    %v578 = vsel %vm574, %v566, 0.0
    %579 = vrot.lane.b32.xlu0 %v349, 111
    %v580 = vpop.permute.xlu0 %579
    %581 = vrot.lane.b32.xlu0 %v350, 111
    %v582 = vpop.permute.xlu0 %581
    %583 = vrot.lane.b32.xlu0 %v351, 111
    %v584 = vpop.permute.xlu0 %583
    %585 = vrot.lane.b32.xlu0 %v352, 111
    %v586 = vpop.permute.xlu0 %585
    %vm587 = vcmask 908288
    %v588 = vsel %vm587, %v580, %v582
    %v589 = vsel %vm587, %v582, %v584
    %v590 = vsel %vm587, %v584, %v586
    %v596 = vsel %vm587, %v586, %v580
    %v597 = vsel %vm333, 1, 0
    %v598 = vsel %vm334, 1, 0
    %v599 = vsel %vm335, 1, 0
    %v600 = vsel %vm336, 1, 0
    %vm601 = vcmp.eq.s32.totalorder %v597, 1
    %vm602 = vcmp.eq.s32.totalorder %v598, 1
    %vm603 = vcmp.eq.s32.totalorder %v599, 1
    %vm604 = vcmp.eq.s32.totalorder %v600, 1
    %v605 = vsel %vm601, %v588, 0.0
    %v606 = vsel %vm602, %v589, 0.0
    %v607 = vsel %vm603, %v590, 0.0
    %v608 = vsel %vm604, %v596, 0.0
    %v609 = vpack.c.bf16 %v413, %v383
    %v610 = vpack.c.bf16 %v414, %v384
    %v611 = vpack.c.bf16 %v415, %v385
    %v612 = vpack.c.bf16 %v416, %v386
    %v613 = vpack.c.bf16 %v473, %v443
    %v614 = vpack.c.bf16 %v474, %v444
    %v615 = vpack.c.bf16 %v475, %v445
    %v616 = vpack.c.bf16 %v476, %v446
    %v617 = vpack.c.bf16 %v515, %v485
    %v618 = vpack.c.bf16 %v516, %v486
    %v619 = vpack.c.bf16 %v517, %v487
    %v620 = vpack.c.bf16 %v518, %v488
    %v621 = vpack.c.bf16 %v575, %v545
    %v622 = vpack.c.bf16 %v576, %v546
    %v623 = vpack.c.bf16 %v577, %v547
    %v624 = vpack.c.bf16 %v578, %v548
    %v625 = vpack.c.bf16 %v605, %v605
    %v626 = vpack.c.bf16 %v606, %v606
    %v627 = vpack.c.bf16 %v607, %v607
    %v628 = vpack.c.bf16 %v608, %v608
    %v629 = vld [vmem:[#allocation5] sm:$0xf]
    %v630 = vld [vmem:[#allocation7] sm:$0xff]
    %632 = vset.pattern.permute.xlu0 0
    %633 = vperm.xlu0 %632, %v630
    %v634 = vpop.permute.xlu0 %633
    %vm636 = vcmask 588800
    %v638 = vsel %vm636, %v629, 0
    %vm640 = vcmask 1043456
    %v642 = vsel %vm640, %v625, 0
    %v645 = vsel %vm640, %v626, 0
    %v648 = vsel %vm640, %v627, 0
    %v651 = vsel %vm640, %v628, 0
    %653 = vmatprep.subr.bf16.mxu0 %v610
    %654 = vmatpush1.bf16.msra.mxu0 %v609
    %655 = vmatprep.subr.bf16.mxu0 %v614
    %656 = vmatpush1.bf16.msra.mxu0 %v613
    %657 = vmatprep.subr.bf16.mxu0 %v618
    %658 = vmatpush1.bf16.msra.mxu0 %v617
    %659 = vmatprep.subr.bf16.mxu0 %v622
    %660 = vmatpush1.bf16.msra.mxu0 %v621
    %661 = vmatprep.subr.bf16.mxu0 %v645
    %662 = vmatpush1.bf16.msra.mxu0 %v642
    %663 = vmatprep.subr.bf16.mxu0 0
    %664 = vmatpush1.bf16.msra.mxu0 0
    %665 = vmatprep.subr.bf16.mxu0 0
    %666 = vmatpush1.bf16.msra.mxu0 0
    %667 = vmatprep.subr.bf16.mxu0 0
    %668 = vmatpush1.bf16.msra.mxu0 0
    %669 = vmatprep.subr.bf16.mxu0 0
    %670 = vmatpush1.bf16.msra.mxu0 0
    %671 = vmatprep.subr.bf16.mxu0 0
    %672 = vmatpush1.bf16.msra.mxu0 0
    %673 = vmatprep.subr.bf16.mxu0 0
    %674 = vmatpush1.bf16.msra.mxu0 0
    %675 = vmatprep.subr.bf16.mxu0 0
    %676 = vmatpush1.bf16.msra.mxu0 0
    %677 = vmatprep.subr.bf16.mxu0 0
    %678 = vmatpush1.bf16.msra.mxu0 0
    %679 = vmatprep.subr.bf16.mxu0 0
    %680 = vmatpush1.bf16.msra.mxu0 0
    %681 = vmatprep.subr.bf16.mxu0 0
    %682 = vmatpush1.bf16.msra.mxu0 0
    %683 = vmatprep.subr.bf16.mxu0 0
    %684 = vmatpush1.bf16.msra.mxu0 0
    %685 = vmatprep.mubr.bf16.mxu0 0
    %686 = vmatmul.mubr.bf16.gmra.mrb[0].mxu0 %v638
    %v687 = vpop.f32.mrb[0].mxu0
    %v688 = vadd.f32 %v634, %v687
    %v689 = vpop.f32.mrb[0].mxu0
    %v690 = vadd.f32 %v634, %v689
    %v691 = vpop.f32.mrb[0].mxu0
    %v692 = vpop.f32.mrb[0].mxu0
    %693 = vdwg.mxu0
    %694 = vmatprep.subr.bf16.mxu0 %v612
    %695 = vmatpush1.bf16.msra.mxu0 %v611
    %696 = vmatprep.subr.bf16.mxu0 %v616
    %697 = vmatpush1.bf16.msra.mxu0 %v615
    %698 = vmatprep.subr.bf16.mxu0 %v620
    %699 = vmatpush1.bf16.msra.mxu0 %v619
    %700 = vmatprep.subr.bf16.mxu0 %v624
    %701 = vmatpush1.bf16.msra.mxu0 %v623
    %702 = vmatprep.subr.bf16.mxu0 %v651
    %703 = vmatpush1.bf16.msra.mxu0 %v648
    %704 = vmatprep.subr.bf16.mxu0 0
    %705 = vmatpush1.bf16.msra.mxu0 0
    %706 = vmatprep.subr.bf16.mxu0 0
    %707 = vmatpush1.bf16.msra.mxu0 0
    %708 = vmatprep.subr.bf16.mxu0 0
    %709 = vmatpush1.bf16.msra.mxu0 0
    %710 = vmatprep.subr.bf16.mxu0 0
    %711 = vmatpush1.bf16.msra.mxu0 0
    %712 = vmatprep.subr.bf16.mxu0 0
    %713 = vmatpush1.bf16.msra.mxu0 0
    %714 = vmatprep.subr.bf16.mxu0 0
    %715 = vmatpush1.bf16.msra.mxu0 0
    %716 = vmatprep.subr.bf16.mxu0 0
    %717 = vmatpush1.bf16.msra.mxu0 0
    %718 = vmatprep.subr.bf16.mxu0 0
    %719 = vmatpush1.bf16.msra.mxu0 0
    %720 = vmatprep.subr.bf16.mxu0 0
    %721 = vmatpush1.bf16.msra.mxu0 0
    %722 = vmatprep.subr.bf16.mxu0 0
    %723 = vmatpush1.bf16.msra.mxu0 0
    %724 = vmatprep.subr.bf16.mxu0 0
    %725 = vmatpush1.bf16.msra.mxu0 0
    %726 = vmatprep.mubr.bf16.mxu0 0
    %727 = vmatmul.mubr.bf16.gmra.mrb[0].mxu0 %v638
    %v728 = vpop.f32.mrb[0].mxu0
    %v729 = vadd.f32 %v634, %v728
    %v730 = vpop.f32.mrb[0].mxu0
    %v731 = vadd.f32 %v634, %v730
    %v732 = vpop.f32.mrb[0].mxu0
    %v733 = vpop.f32.mrb[0].mxu0
    %734 = vdwg.mxu0
    %v735 = vld [vmem:[#allocation10] sm:$0xff]
    %v736 = vld [vmem:[#allocation10 + $0x8] sm:$0xff]
    %v737 = vld [vmem:[#allocation10 + $0x10] sm:$0xff]
    %v738 = vld [vmem:[#allocation10 + $0x18] sm:$0xff]
    %v739 = vld [vmem:[#allocation8] sm:$0xff]
    %741 = vset.pattern.permute.xlu0 0
    %742 = vperm.xlu0 %741, %v739
    %v743 = vpop.permute.xlu0 %742
    %v745 = vmul.f32 %v735, %v743
    %v746 = vmul.f32 %v736, %v743
    %v747 = vmul.f32 %v737, %v743
    %v748 = vmul.f32 %v738, %v743
    %v749 = vadd.f32 %v688, %v745
    %v750 = vadd.f32 %v690, %v746
    %v751 = vadd.f32 %v729, %v747
    %v752 = vadd.f32 %v731, %v748
    %v753 = vld [vmem:[#allocation11] sm:$0xff]
    %v754 = vld [vmem:[#allocation13] sm:$0xff]
    %v755 = vsel %vm341, 1, 0
    %v756 = vsel %vm342, 1, 0
    %v757 = vsel %vm343, 1, 0
    %v758 = vsel %vm344, 1, 0
    %vm759 = vcmp.eq.s32.totalorder %v755, 1
    %vm760 = vcmp.eq.s32.totalorder %v756, 1
    %vm761 = vcmp.eq.s32.totalorder %v757, 1
    %vm762 = vcmp.eq.s32.totalorder %v758, 1
    %v763 = vsel %vm759, %v749, 0.0
    %v764 = vsel %vm760, %v750, 0.0
    %v765 = vsel %vm761, %v751, 0.0
    %v766 = vsel %vm762, %v752, 0.0
    %v767 = vadd.f32 %v763, %v764
    %v768 = vadd.f32 %v767, %v765
    %v769 = vadd.f32 %v768, %v766
    %770 = vadd.xlane.f32.xlu0 %v769
    %v771 = vpop.xlane.xlu0 %770
    %v772 = vmul.f32 %v771, 0.00390625
    %v773 = vsel %vm759, %v772, 0.0
    %v774 = vsel %vm760, %v772, 0.0
    %v775 = vsel %vm761, %v772, 0.0
    %v776 = vsel %vm762, %v772, 0.0
    %v777 = vsel %vm345, 1, 0
    %v778 = vsel %vm346, 1, 0
    %v779 = vsel %vm347, 1, 0
    %v780 = vsel %vm348, 1, 0
    %vm781 = vcmp.eq.s32.totalorder %v777, 1
    %vm782 = vcmp.eq.s32.totalorder %v778, 1
    %vm783 = vcmp.eq.s32.totalorder %v779, 1
    %vm784 = vcmp.eq.s32.totalorder %v780, 1
    %v785 = vsel %vm781, %v749, 0.0
    %v786 = vsel %vm782, %v750, 0.0
    %v787 = vsel %vm783, %v751, 0.0
    %v788 = vsel %vm784, %v752, 0.0
    %v789 = vadd.f32 %v785, %v786
    %v790 = vadd.f32 %v789, %v787
    %v791 = vadd.f32 %v790, %v788
    %792 = vadd.xlane.f32.xlu0 %v791
    %v793 = vpop.xlane.xlu0 %792
    %v794 = vmul.f32 %v793, 0.00390625
    %v795 = vsel %vm781, %v794, %v773
    %v796 = vsel %vm782, %v794, %v774
    %v797 = vsel %vm783, %v794, %v775
    %v798 = vsel %vm784, %v794, %v776
    %v799 = vsub.f32 %v749, %v795
    %v800 = vsub.f32 %v750, %v796
    %v801 = vsub.f32 %v751, %v797
    %v802 = vsub.f32 %v752, %v798
    %v803 = vmul.f32 %v799, %v799
    %v804 = vmul.f32 %v800, %v800
    %v805 = vmul.f32 %v801, %v801
    %v806 = vmul.f32 %v802, %v802
    %v807 = vsel %vm759, %v803, 0.0
    %v808 = vsel %vm760, %v804, 0.0
    %v809 = vsel %vm761, %v805, 0.0
    %v810 = vsel %vm762, %v806, 0.0
    %v811 = vadd.f32 %v807, %v808
    %v812 = vadd.f32 %v811, %v809
    %v813 = vadd.f32 %v812, %v810
    %814 = vadd.xlane.f32.xlu0 %v813
    %v815 = vpop.xlane.xlu0 %814
    %v816 = vmul.f32 %v815, 0.003921569
    %v817 = vadd.f32 %v816, 1e-08
    %v818 = vrsqrt.pop %v817
    %v819 = vmul.f32 %v753, %v818
    %821 = vset.pattern.permute.xlu0 0
    %822 = vperm.xlu0 %821, %v819
    %v823 = vpop.permute.xlu0 %822
    %v825 = vmul.f32 %v799, %v823
    %v826 = vmul.f32 %v800, %v823
    %v827 = vmul.f32 %v801, %v823
    %v828 = vmul.f32 %v802, %v823
    %830 = vset.pattern.permute.xlu0 0
    %831 = vperm.xlu0 %830, %v754
    %v832 = vpop.permute.xlu0 %831
    %v834 = vadd.f32 %v825, %v832
    %v835 = vadd.f32 %v826, %v832
    %v836 = vadd.f32 %v827, %v832
    %v837 = vadd.f32 %v828, %v832
    %v838 = vsel %vm759, %v834, 0.0
    %v839 = vsel %vm760, %v835, 0.0
    %v840 = vsel %vm761, %v836, 0.0
    %v841 = vsel %vm762, %v837, 0.0
    %v842 = vsel %vm781, %v803, 0.0
    %v843 = vsel %vm782, %v804, 0.0
    %v844 = vsel %vm783, %v805, 0.0
    %v845 = vsel %vm784, %v806, 0.0
    %v846 = vadd.f32 %v842, %v843
    %v847 = vadd.f32 %v846, %v844
    %v848 = vadd.f32 %v847, %v845
    %849 = vadd.xlane.f32.xlu0 %v848
    %v850 = vpop.xlane.xlu0 %849
    %v851 = vmul.f32 %v850, 0.003921569
    %v852 = vadd.f32 %v851, 1e-08
    %v853 = vrsqrt.pop %v852
    %v854 = vmul.f32 %v753, %v853
    %856 = vset.pattern.permute.xlu0 1
    %857 = vperm.xlu0 %856, %v854
    %v858 = vpop.permute.xlu0 %857
    %v860 = vmul.f32 %v799, %v858
    %v861 = vmul.f32 %v800, %v858
    %v862 = vmul.f32 %v801, %v858
    %v863 = vmul.f32 %v802, %v858
    %864 = vset.pattern.permute.xlu0 1
    %865 = vperm.xlu0 %864, %v754
    %v866 = vpop.permute.xlu0 %865
    %v868 = vadd.f32 %v860, %v866
    %v869 = vadd.f32 %v861, %v866
    %v870 = vadd.f32 %v862, %v866
    %v871 = vadd.f32 %v863, %v866
    %v872 = vsel %vm781, %v868, %v838
    %v873 = vsel %vm782, %v869, %v839
    %v874 = vsel %vm783, %v870, %v840
    %v875 = vsel %vm784, %v871, %v841
    %vm876 = vcmp.ge.f32.partialorder %v872, 0.0
    %vm877 = vcmp.ge.f32.partialorder %v873, 0.0
    %vm878 = vcmp.ge.f32.partialorder %v874, 0.0
    %vm879 = vcmp.ge.f32.partialorder %v875, 0.0
    %v880 = vmul.f32 %v872, 0.2
    %v881 = vmul.f32 %v873, 0.2
    %v882 = vmul.f32 %v874, 0.2
    %v883 = vmul.f32 %v875, 0.2
    %v884 = vsel %vm876, %v872, %v880
    %v885 = vsel %vm877, %v873, %v881
    %v886 = vsel %vm878, %v874, %v882
    %v887 = vsel %vm879, %v875, %v883
    %889 = vrot.lane.b32.xlu0 %v887, 17
    %v890 = vpop.permute.xlu0 %889
    %895 = vrot.lane.b32.xlu0 %v884, 17
    %v896 = vpop.permute.xlu0 %895
    %897 = vrot.lane.b32.xlu0 %v885, 17
    %v898 = vpop.permute.xlu0 %897
    %899 = vrot.lane.b32.xlu0 %v886, 17
    %v900 = vpop.permute.xlu0 %899
    %v901 = vsel %vm366, %v896, %v898
    %v902 = vsel %vm366, %v898, %v900
    %v903 = vsel %vm366, %v900, %v890
    %v908 = vsel %vm366, %v890, %v896
    %v909 = vsel %vm379, %v908, 0.0
    %v910 = vsel %vm380, %v901, 0.0
    %v911 = vsel %vm381, %v902, 0.0
    %v912 = vsel %vm382, %v903, 0.0
    %913 = vrot.lane.b32.xlu0 %v887, 16
    %v914 = vpop.permute.xlu0 %913
    %916 = vrot.lane.b32.xlu0 %v884, 16
    %v917 = vpop.permute.xlu0 %916
    %918 = vrot.lane.b32.xlu0 %v885, 16
    %v919 = vpop.permute.xlu0 %918
    %920 = vrot.lane.b32.xlu0 %v886, 16
    %v921 = vpop.permute.xlu0 %920
    %v922 = vsel %vm396, %v917, %v919
    %v923 = vsel %vm396, %v919, %v921
    %v924 = vsel %vm396, %v921, %v914
    %v929 = vsel %vm396, %v914, %v917
    %v930 = vsel %vm409, %v929, 0.0
    %v931 = vsel %vm410, %v922, 0.0
    %v932 = vsel %vm411, %v923, 0.0
    %v933 = vsel %vm412, %v924, 0.0
    %934 = vrot.lane.b32.xlu0 %v887, 15
    %v935 = vpop.permute.xlu0 %934
    %937 = vrot.lane.b32.xlu0 %v884, 15
    %v938 = vpop.permute.xlu0 %937
    %939 = vrot.lane.b32.xlu0 %v885, 15
    %v940 = vpop.permute.xlu0 %939
    %941 = vrot.lane.b32.xlu0 %v886, 15
    %v942 = vpop.permute.xlu0 %941
    %v943 = vsel %vm426, %v938, %v940
    %v944 = vsel %vm426, %v940, %v942
    %v945 = vsel %vm426, %v942, %v935
    %v950 = vsel %vm426, %v935, %v938
    %v951 = vsel %vm439, %v950, 0.0
    %v952 = vsel %vm440, %v943, 0.0
    %v953 = vsel %vm441, %v944, 0.0
    %v954 = vsel %vm442, %v945, 0.0
    %955 = vrot.lane.b32.xlu0 %v887, 1
    %v956 = vpop.permute.xlu0 %955
    %958 = vrot.lane.b32.xlu0 %v884, 1
    %v959 = vpop.permute.xlu0 %958
    %960 = vrot.lane.b32.xlu0 %v885, 1
    %v961 = vpop.permute.xlu0 %960
    %962 = vrot.lane.b32.xlu0 %v886, 1
    %v963 = vpop.permute.xlu0 %962
    %v964 = vsel %vm456, %v959, %v961
    %v965 = vsel %vm456, %v961, %v963
    %v966 = vsel %vm456, %v963, %v956
    %v971 = vsel %vm456, %v956, %v959
    %v972 = vsel %vm469, %v971, 0.0
    %v973 = vsel %vm470, %v964, 0.0
    %v974 = vsel %vm471, %v965, 0.0
    %v975 = vsel %vm472, %v966, 0.0
    %v976 = vsel %vm481, %v884, 0.0
    %v977 = vsel %vm482, %v885, 0.0
    %v978 = vsel %vm483, %v886, 0.0
    %v979 = vsel %vm484, %v887, 0.0
    %980 = vrot.lane.b32.xlu0 %v884, 127
    %v981 = vpop.permute.xlu0 %980
    %982 = vrot.lane.b32.xlu0 %v885, 127
    %v983 = vpop.permute.xlu0 %982
    %984 = vrot.lane.b32.xlu0 %v886, 127
    %v985 = vpop.permute.xlu0 %984
    %986 = vrot.lane.b32.xlu0 %v887, 127
    %v987 = vpop.permute.xlu0 %986
    %v988 = vsel %vm497, %v981, %v983
    %v989 = vsel %vm497, %v983, %v985
    %v990 = vsel %vm497, %v985, %v987
    %v996 = vsel %vm497, %v987, %v981
    %v997 = vsel %vm511, %v988, 0.0
    %v998 = vsel %vm512, %v989, 0.0
    %v999 = vsel %vm513, %v990, 0.0
    %v1000 = vsel %vm514, %v996, 0.0
    %1001 = vrot.lane.b32.xlu0 %v884, 113
    %v1002 = vpop.permute.xlu0 %1001
    %1003 = vrot.lane.b32.xlu0 %v885, 113
    %v1004 = vpop.permute.xlu0 %1003
    %1005 = vrot.lane.b32.xlu0 %v886, 113
    %v1006 = vpop.permute.xlu0 %1005
    %1007 = vrot.lane.b32.xlu0 %v887, 113
    %v1008 = vpop.permute.xlu0 %1007
    %v1009 = vsel %vm527, %v1002, %v1004
    %v1010 = vsel %vm527, %v1004, %v1006
    %v1011 = vsel %vm527, %v1006, %v1008
    %v1017 = vsel %vm527, %v1008, %v1002
    %v1018 = vsel %vm541, %v1009, 0.0
    %v1019 = vsel %vm542, %v1010, 0.0
    %v1020 = vsel %vm543, %v1011, 0.0
    %v1021 = vsel %vm544, %v1017, 0.0
    %1022 = vrot.lane.b32.xlu0 %v884, 112
    %v1023 = vpop.permute.xlu0 %1022
    %1024 = vrot.lane.b32.xlu0 %v885, 112
    %v1025 = vpop.permute.xlu0 %1024
    %1026 = vrot.lane.b32.xlu0 %v886, 112
    %v1027 = vpop.permute.xlu0 %1026
    %1028 = vrot.lane.b32.xlu0 %v887, 112
    %v1029 = vpop.permute.xlu0 %1028
    %v1030 = vsel %vm557, %v1023, %v1025
    %v1031 = vsel %vm557, %v1025, %v1027
    %v1032 = vsel %vm557, %v1027, %v1029
    %v1038 = vsel %vm557, %v1029, %v1023
    %v1039 = vsel %vm571, %v1030, 0.0
    %v1040 = vsel %vm572, %v1031, 0.0
    %v1041 = vsel %vm573, %v1032, 0.0
    %v1042 = vsel %vm574, %v1038, 0.0
    %1043 = vrot.lane.b32.xlu0 %v884, 111
    %v1044 = vpop.permute.xlu0 %1043
    %1045 = vrot.lane.b32.xlu0 %v885, 111
    %v1046 = vpop.permute.xlu0 %1045
    %1047 = vrot.lane.b32.xlu0 %v886, 111
    %v1048 = vpop.permute.xlu0 %1047
    %1049 = vrot.lane.b32.xlu0 %v887, 111
    %v1050 = vpop.permute.xlu0 %1049
    %v1051 = vsel %vm587, %v1044, %v1046
    %v1052 = vsel %vm587, %v1046, %v1048
    %v1053 = vsel %vm587, %v1048, %v1050
    %v1059 = vsel %vm587, %v1050, %v1044
    %v1060 = vsel %vm601, %v1051, 0.0
    %v1061 = vsel %vm602, %v1052, 0.0
    %v1062 = vsel %vm603, %v1053, 0.0
    %v1063 = vsel %vm604, %v1059, 0.0
    %v1064 = vpack.c.bf16 %v930, %v909
    %v1065 = vpack.c.bf16 %v931, %v910
    %v1066 = vpack.c.bf16 %v932, %v911
    %v1067 = vpack.c.bf16 %v933, %v912
    %v1068 = vpack.c.bf16 %v972, %v951
    %v1069 = vpack.c.bf16 %v973, %v952
    %v1070 = vpack.c.bf16 %v974, %v953
    %v1071 = vpack.c.bf16 %v975, %v954
    %v1072 = vpack.c.bf16 %v997, %v976
    %v1073 = vpack.c.bf16 %v998, %v977
    %v1074 = vpack.c.bf16 %v999, %v978
    %v1075 = vpack.c.bf16 %v1000, %v979
    %v1076 = vpack.c.bf16 %v1039, %v1018
    %v1077 = vpack.c.bf16 %v1040, %v1019
    %v1078 = vpack.c.bf16 %v1041, %v1020
    %v1079 = vpack.c.bf16 %v1042, %v1021
    %v1080 = vpack.c.bf16 %v1060, %v1060
    %v1081 = vpack.c.bf16 %v1061, %v1061
    %v1082 = vpack.c.bf16 %v1062, %v1062
    %v1083 = vpack.c.bf16 %v1063, %v1063
    %v1084 = vld [vmem:[#allocation14] sm:$0xf]
    %v1085 = vld [vmem:[#allocation16] sm:$0xff]
    %1087 = vset.pattern.permute.xlu0 0
    %1088 = vperm.xlu0 %1087, %v1085
    %v1089 = vpop.permute.xlu0 %1088
    %v1092 = vsel %vm636, %v1084, 0
    %v1095 = vsel %vm640, %v1080, 0
    %v1098 = vsel %vm640, %v1081, 0
    %v1101 = vsel %vm640, %v1082, 0
    %v1104 = vsel %vm640, %v1083, 0
    %1106 = vmatprep.subr.bf16.mxu0 %v1065
    %1107 = vmatpush1.bf16.msra.mxu0 %v1064
    %1108 = vmatprep.subr.bf16.mxu0 %v1069
    %1109 = vmatpush1.bf16.msra.mxu0 %v1068
    %1110 = vmatprep.subr.bf16.mxu0 %v1073
    %1111 = vmatpush1.bf16.msra.mxu0 %v1072
    %1112 = vmatprep.subr.bf16.mxu0 %v1077
    %1113 = vmatpush1.bf16.msra.mxu0 %v1076
    %1114 = vmatprep.subr.bf16.mxu0 %v1098
    %1115 = vmatpush1.bf16.msra.mxu0 %v1095
    %1116 = vmatprep.subr.bf16.mxu0 0
    %1117 = vmatpush1.bf16.msra.mxu0 0
    %1118 = vmatprep.subr.bf16.mxu0 0
    %1119 = vmatpush1.bf16.msra.mxu0 0
    %1120 = vmatprep.subr.bf16.mxu0 0
    %1121 = vmatpush1.bf16.msra.mxu0 0
    %1122 = vmatprep.subr.bf16.mxu0 0
    %1123 = vmatpush1.bf16.msra.mxu0 0
    %1124 = vmatprep.subr.bf16.mxu0 0
    %1125 = vmatpush1.bf16.msra.mxu0 0
    %1126 = vmatprep.subr.bf16.mxu0 0
    %1127 = vmatpush1.bf16.msra.mxu0 0
    %1128 = vmatprep.subr.bf16.mxu0 0
    %1129 = vmatpush1.bf16.msra.mxu0 0
    %1130 = vmatprep.subr.bf16.mxu0 0
    %1131 = vmatpush1.bf16.msra.mxu0 0
    %1132 = vmatprep.subr.bf16.mxu0 0
    %1133 = vmatpush1.bf16.msra.mxu0 0
    %1134 = vmatprep.subr.bf16.mxu0 0
    %1135 = vmatpush1.bf16.msra.mxu0 0
    %1136 = vmatprep.subr.bf16.mxu0 0
    %1137 = vmatpush1.bf16.msra.mxu0 0
    %1138 = vmatprep.mubr.bf16.mxu0 0
    %1139 = vmatmul.mubr.bf16.gmra.mrb[0].mxu0 %v1092
    %v1140 = vpop.f32.mrb[0].mxu0
    %v1141 = vadd.f32 %v1089, %v1140
    %v1142 = vpop.f32.mrb[0].mxu0
    %v1143 = vadd.f32 %v1089, %v1142
    %v1144 = vpop.f32.mrb[0].mxu0
    %v1145 = vpop.f32.mrb[0].mxu0
    %1146 = vdwg.mxu0
    %1147 = vmatprep.subr.bf16.mxu0 %v1067
    %1148 = vmatpush1.bf16.msra.mxu0 %v1066
    %1149 = vmatprep.subr.bf16.mxu0 %v1071
    %1150 = vmatpush1.bf16.msra.mxu0 %v1070
    %1151 = vmatprep.subr.bf16.mxu0 %v1075
    %1152 = vmatpush1.bf16.msra.mxu0 %v1074
    %1153 = vmatprep.subr.bf16.mxu0 %v1079
    %1154 = vmatpush1.bf16.msra.mxu0 %v1078
    %1155 = vmatprep.subr.bf16.mxu0 %v1104
    %1156 = vmatpush1.bf16.msra.mxu0 %v1101
    %1157 = vmatprep.subr.bf16.mxu0 0
    %1158 = vmatpush1.bf16.msra.mxu0 0
    %1159 = vmatprep.subr.bf16.mxu0 0
    %1160 = vmatpush1.bf16.msra.mxu0 0
    %1161 = vmatprep.subr.bf16.mxu0 0
    %1162 = vmatpush1.bf16.msra.mxu0 0
    %1163 = vmatprep.subr.bf16.mxu0 0
    %1164 = vmatpush1.bf16.msra.mxu0 0
    %1165 = vmatprep.subr.bf16.mxu0 0
    %1166 = vmatpush1.bf16.msra.mxu0 0
    %1167 = vmatprep.subr.bf16.mxu0 0
    %1168 = vmatpush1.bf16.msra.mxu0 0
    %1169 = vmatprep.subr.bf16.mxu0 0
    %1170 = vmatpush1.bf16.msra.mxu0 0
    %1171 = vmatprep.subr.bf16.mxu0 0
    %1172 = vmatpush1.bf16.msra.mxu0 0
    %1173 = vmatprep.subr.bf16.mxu0 0
    %1174 = vmatpush1.bf16.msra.mxu0 0
    %1175 = vmatprep.subr.bf16.mxu0 0
    %1176 = vmatpush1.bf16.msra.mxu0 0
    %1177 = vmatprep.subr.bf16.mxu0 0
    %1178 = vmatpush1.bf16.msra.mxu0 0
    %1179 = vmatprep.mubr.bf16.mxu0 0
    %1180 = vmatmul.mubr.bf16.gmra.mrb[0].mxu0 %v1092
    %v1181 = vpop.f32.mrb[0].mxu0
    %v1182 = vadd.f32 %v1089, %v1181
    %v1183 = vpop.f32.mrb[0].mxu0
    %v1184 = vadd.f32 %v1089, %v1183
    %v1185 = vpop.f32.mrb[0].mxu0
    %v1186 = vpop.f32.mrb[0].mxu0
    %1187 = vdwg.mxu0
    %v1188 = vld [vmem:[#allocation19] sm:$0xff]
    %v1189 = vld [vmem:[#allocation19 + $0x8] sm:$0xff]
    %v1190 = vld [vmem:[#allocation19 + $0x10] sm:$0xff]
    %v1191 = vld [vmem:[#allocation19 + $0x18] sm:$0xff]
    %v1192 = vld [vmem:[#allocation17] sm:$0xff]
    %1194 = vset.pattern.permute.xlu0 0
    %1195 = vperm.xlu0 %1194, %v1192
    %v1196 = vpop.permute.xlu0 %1195
    %v1198 = vmul.f32 %v1188, %v1196
    %v1199 = vmul.f32 %v1189, %v1196
    %v1200 = vmul.f32 %v1190, %v1196
    %v1201 = vmul.f32 %v1191, %v1196
    %v1202 = vadd.f32 %v1141, %v1198
    %v1203 = vadd.f32 %v1143, %v1199
    %v1204 = vadd.f32 %v1182, %v1200
    %v1205 = vadd.f32 %v1184, %v1201
    %v1206 = vld [vmem:[#allocation20] sm:$0xff]
    %v1207 = vld [vmem:[#allocation22] sm:$0xff]
    %v1208 = vsel %vm759, %v1202, 0.0
    %v1209 = vsel %vm760, %v1203, 0.0
    %v1210 = vsel %vm761, %v1204, 0.0
    %v1211 = vsel %vm762, %v1205, 0.0
    %v1212 = vadd.f32 %v1208, %v1209
    %v1213 = vadd.f32 %v1212, %v1210
    %v1214 = vadd.f32 %v1213, %v1211
    %1215 = vadd.xlane.f32.xlu0 %v1214
    %v1216 = vpop.xlane.xlu0 %1215
    %v1217 = vmul.f32 %v1216, 0.00390625
    %v1218 = vsel %vm759, %v1217, 0.0
    %v1219 = vsel %vm760, %v1217, 0.0
    %v1220 = vsel %vm761, %v1217, 0.0
    %v1221 = vsel %vm762, %v1217, 0.0
    %v1222 = vsel %vm781, %v1202, 0.0
    %v1223 = vsel %vm782, %v1203, 0.0
    %v1224 = vsel %vm783, %v1204, 0.0
    %v1225 = vsel %vm784, %v1205, 0.0
    %v1226 = vadd.f32 %v1222, %v1223
    %v1227 = vadd.f32 %v1226, %v1224
    %v1228 = vadd.f32 %v1227, %v1225
    %1229 = vadd.xlane.f32.xlu0 %v1228
    %v1230 = vpop.xlane.xlu0 %1229
    %v1231 = vmul.f32 %v1230, 0.00390625
    %v1232 = vsel %vm781, %v1231, %v1218
    %v1233 = vsel %vm782, %v1231, %v1219
    %v1234 = vsel %vm783, %v1231, %v1220
    %v1235 = vsel %vm784, %v1231, %v1221
    %v1236 = vsub.f32 %v1202, %v1232
    %v1237 = vsub.f32 %v1203, %v1233
    %v1238 = vsub.f32 %v1204, %v1234
    %v1239 = vsub.f32 %v1205, %v1235
    %v1240 = vmul.f32 %v1236, %v1236
    %v1241 = vmul.f32 %v1237, %v1237
    %v1242 = vmul.f32 %v1238, %v1238
    %v1243 = vmul.f32 %v1239, %v1239
    %v1244 = vsel %vm759, %v1240, 0.0
    %v1245 = vsel %vm760, %v1241, 0.0
    %v1246 = vsel %vm761, %v1242, 0.0
    %v1247 = vsel %vm762, %v1243, 0.0
    %v1248 = vadd.f32 %v1244, %v1245
    %v1249 = vadd.f32 %v1248, %v1246
    %v1250 = vadd.f32 %v1249, %v1247
    %1251 = vadd.xlane.f32.xlu0 %v1250
    %v1252 = vpop.xlane.xlu0 %1251
    %v1253 = vmul.f32 %v1252, 0.003921569
    %v1254 = vadd.f32 %v1253, 1e-08
    %v1255 = vrsqrt.pop %v1254
    %v1256 = vmul.f32 %v1206, %v1255
    %1258 = vset.pattern.permute.xlu0 0
    %1259 = vperm.xlu0 %1258, %v1256
    %v1260 = vpop.permute.xlu0 %1259
    %v1262 = vmul.f32 %v1236, %v1260
    %v1263 = vmul.f32 %v1237, %v1260
    %v1264 = vmul.f32 %v1238, %v1260
    %v1265 = vmul.f32 %v1239, %v1260
    %1267 = vset.pattern.permute.xlu0 0
    %1268 = vperm.xlu0 %1267, %v1207
    %v1269 = vpop.permute.xlu0 %1268
    %v1271 = vadd.f32 %v1262, %v1269
    %v1272 = vadd.f32 %v1263, %v1269
    %v1273 = vadd.f32 %v1264, %v1269
    %v1274 = vadd.f32 %v1265, %v1269
    %v1275 = vsel %vm759, %v1271, 0.0
    %v1276 = vsel %vm760, %v1272, 0.0
    %v1277 = vsel %vm761, %v1273, 0.0
    %v1278 = vsel %vm762, %v1274, 0.0
    %v1279 = vsel %vm781, %v1240, 0.0
    %v1280 = vsel %vm782, %v1241, 0.0
    %v1281 = vsel %vm783, %v1242, 0.0
    %v1282 = vsel %vm784, %v1243, 0.0
    %v1283 = vadd.f32 %v1279, %v1280
    %v1284 = vadd.f32 %v1283, %v1281
    %v1285 = vadd.f32 %v1284, %v1282
    %1286 = vadd.xlane.f32.xlu0 %v1285
    %v1287 = vpop.xlane.xlu0 %1286
    %v1288 = vmul.f32 %v1287, 0.003921569
    %v1289 = vadd.f32 %v1288, 1e-08
    %v1290 = vrsqrt.pop %v1289
    %v1291 = vmul.f32 %v1206, %v1290
    %1293 = vset.pattern.permute.xlu0 1
    %1294 = vperm.xlu0 %1293, %v1291
    %v1295 = vpop.permute.xlu0 %1294
    %v1297 = vmul.f32 %v1236, %v1295
    %v1298 = vmul.f32 %v1237, %v1295
    %v1299 = vmul.f32 %v1238, %v1295
    %v1300 = vmul.f32 %v1239, %v1295
    %1301 = vset.pattern.permute.xlu0 1
    %1302 = vperm.xlu0 %1301, %v1207
    %v1303 = vpop.permute.xlu0 %1302
    %v1305 = vadd.f32 %v1297, %v1303
    %v1306 = vadd.f32 %v1298, %v1303
    %v1307 = vadd.f32 %v1299, %v1303
    %v1308 = vadd.f32 %v1300, %v1303
    %v1309 = vsel %vm781, %v1305, %v1275
    %v1310 = vsel %vm782, %v1306, %v1276
    %v1311 = vsel %vm783, %v1307, %v1277
    %v1312 = vsel %vm784, %v1308, %v1278
    %vm1313 = vcmp.ge.f32.partialorder %v1309, 0.0
    %vm1314 = vcmp.ge.f32.partialorder %v1310, 0.0
    %vm1315 = vcmp.ge.f32.partialorder %v1311, 0.0
    %vm1316 = vcmp.ge.f32.partialorder %v1312, 0.0
    %v1317 = vmul.f32 %v1309, 0.2
    %v1318 = vmul.f32 %v1310, 0.2
    %v1319 = vmul.f32 %v1311, 0.2
    %v1320 = vmul.f32 %v1312, 0.2
    %v1321 = vsel %vm1313, %v1309, %v1317
    %v1322 = vsel %vm1314, %v1310, %v1318
    %v1323 = vsel %vm1315, %v1311, %v1319
    %v1324 = vsel %vm1316, %v1312, %v1320
    %1325 = vst [vmem:[#allocation23] sm:$0xff] %v1321
    %1326 = vst [vmem:[#allocation23 + $0x8] sm:$0xff] %v1322
    %1327 = vst [vmem:[#allocation23 + $0x10] sm:$0xff] %v1323
    %1328 = vst [vmem:[#allocation23 + $0x18] sm:$0xff] %v1324
    // Predicated region
    $region106: #{gconv_block.3} parent=1 // pred_check
      _
    $region107: #{gconv_block.3} parent=1 // pred_check_branch
      %1330 = sbr.rel (0) target = $region109
    $region108: #{gconv_block.3} parent=1 // pred_region
      %s1332 = ssub.s32 512, 512
      %1333 = vsyncadd [#allocation4], %s1332
      %s1335 = sshll.u32 [#allocation23], 4
      %s1336 = int_to_ptr.vmem [resolvable:$true] %s1335
      %1338 = dma.vmem_to_hbm [thread:$0]  %s1336, 512, %s13, [#allocation4]
    $region109: #{gconv_block.3} parent=1 // pred_fallthru
      _
    // Predicated region
    $region110: #{gconv_block.3} parent=1 // pred_check
      _
    $region111: #{gconv_block.3} parent=1 // pred_check_branch
      %1340 = sbr.rel (0) target = $region113
    $region112: #{gconv_block.3} parent=1 // pred_region
      %1341 = dma.done [#allocation4], 512
    $region113: #{gconv_block.3} parent=1 // pred_fallthru
      _
    %1342 = vsyncpa [#allocation3], 1
    %1343 = vsyncpa [#allocation6], 1
    %1344 = vsyncpa [#allocation9], 1
    %1345 = vsyncpa [#allocation12], 1
    %1346 = vsyncpa [#allocation15], 1
    %1347 = vsyncpa [#allocation18], 1
    %1348 = vsyncpa [#allocation21], 1
    %1349 = vsyncpa [#allocation4], 1

</llo_original>
